<compile_context>
chip_gen: v7x
topology: tpu7x:2x2x1
jax: 0.10.0
libtpu: 0.0.40
codegen_flags: <defaults>
</compile_context>

<pallas_src>
import math

import numpy as np
import jax
import jax.numpy as jnp
from jax.experimental import pallas as pl
from jax.experimental.pallas import tpu as pltpu

# ---------------- small config consistent with the module ----------------
B = 2            # batch
T = 8            # sequence length
EMB = 64         # emb_dim
N_HEADS = 4      # n_heads
N_KV = 2         # n_kv_groups
HD = EMB // N_HEADS          # head_dim = 16
HIDDEN = 128     # hidden_dim
CTX = 16         # context_length
EPS = 1e-5
ROPE_THETA = 10000.0

BT = B * T                   # flattened token count = 16
SCALE = 1.0 / math.sqrt(HD)  # 0.25 (power of two -> exact folding)
NEG = -1e30

F32 = jnp.float32
BF16 = jnp.bfloat16

# misc packing layout (rows of a (2T+2, 128) f32 array)
ROW_COS0 = 0
ROW_SIN0 = T
ROW_NORM = 2 * T          # [norm1_w (64) | norm2_w (64)]
ROW_BIAS = 2 * T + 1      # [proj_bias (64) | zeros  (64)]
MISC_ROWS = 2 * T + 2


# ---------------- Pallas kernel (one sequence per grid step) ----------------
def transformer_block_kernel(x_ref, misc_ref, wqkv_ref, wo_ref, w12_ref,
                             w3_ref, o_ref):
    x = x_ref[...]                                           # (T, EMB) f32
    misc = misc_ref[...]                                     # (2T+2, 128) f32
    cos_slab = misc[ROW_COS0:ROW_COS0 + T, :]                # (T, 128) [cos|cos]
    sin_slab = misc[ROW_SIN0:ROW_SIN0 + T, :]                # (T, 128) [sin|sin]
    n1w = misc[ROW_NORM:ROW_NORM + 1, 0:EMB]                 # (1, EMB)
    n2w = misc[ROW_NORM:ROW_NORM + 1, EMB:2 * EMB]           # (1, EMB)
    bo = misc[ROW_BIAS:ROW_BIAS + 1, 0:EMB]                  # (1, EMB)

    # ---- RMSNorm 1 (f32) + cast once for the MXU ----
    ms = jnp.mean(x * x, axis=-1, keepdims=True)
    xb = (x * jax.lax.rsqrt(ms + EPS) * n1w).astype(BF16)

    # ---- single fused QKV projection, columns = [q | k | qr | kr | v] ----
    qkv = jnp.dot(xb, wqkv_ref[...], preferred_element_type=F32)   # (T, 5*EMB)
    qk = qkv[:, 0:2 * EMB]            # [q*scale | k_rep]                (T,128)
    qk_rot = qkv[:, 2 * EMB:4 * EMB]  # [(q@rot)*scale | k_rep@rot]      (T,128)
    v = qkv[:, 4 * EMB:5 * EMB]       # v repeated per head              (T, 64)

    # ---- interleaved RoPE: two full-width 128-lane FMAs ----
    roped = qk * cos_slab + qk_rot * sin_slab                # (T, 128) f32
    qb = roped[:, 0:EMB].astype(BF16)                        # scaled, roped q
    kb = roped[:, EMB:2 * EMB].astype(BF16)                  # roped k (repeated)
    vb = v.astype(BF16)

    # ---- causal mask built in-kernel (no DMA, pure VPU) ----
    row = jax.lax.broadcasted_iota(jnp.int32, (T, T), 0)
    col = jax.lax.broadcasted_iota(jnp.int32, (T, T), 1)
    mask = jnp.where(row >= col, 0.0, NEG).astype(F32)       # additive, f32 only

    # ---- GQA attention; per-head outputs collected, ONE output projection ---
    heads = []
    for h in range(N_HEADS):
        sl = slice(h * HD, (h + 1) * HD)
        s = jax.lax.dot_general(qb[:, sl], kb[:, sl],
                                (((1,), (1,)), ((), ())),
                                preferred_element_type=F32) + mask
        m = jnp.max(s, axis=-1, keepdims=True)
        p = jnp.exp(s - m)
        p = p * pl.reciprocal(jnp.sum(p, axis=-1, keepdims=True), approx=True)
        oh = jnp.dot(p.astype(BF16), vb[:, sl], preferred_element_type=F32)
        heads.append(oh.astype(BF16))
    attn_cat = jnp.concatenate(heads, axis=-1)               # (T, EMB) bf16
    attn = (jnp.dot(attn_cat, wo_ref[...], preferred_element_type=F32)
            + bo).astype(BF16)
    x1 = x + attn.astype(F32)                                # residual 1

    # ---- RMSNorm 2 + fused SwiGLU FFN ----
    ms2 = jnp.mean(x1 * x1, axis=-1, keepdims=True)
    xn2 = (x1 * jax.lax.rsqrt(ms2 + EPS) * n2w).astype(BF16)
    h12 = jnp.dot(xn2, w12_ref[...], preferred_element_type=F32)   # (T, 2*HID)
    gate = (jax.nn.silu(h12[:, :HIDDEN]) * h12[:, HIDDEN:]).astype(BF16)
    ff = jnp.dot(gate, w3_ref[...], preferred_element_type=F32).astype(BF16)

    o_ref[...] = x1 + ff.astype(F32)                         # residual 2


def transformer_block(x, kparams):
    misc, wqkv, wo, w12, w3 = kparams
    x_flat = x.reshape(BT, EMB)

    def const_spec(a):
        # whole array, same block every step -> DMA'd once, VMEM-resident
        return pl.BlockSpec(a.shape, lambda b: (0, 0))

    in_specs = [
        pl.BlockSpec((T, EMB), lambda b: (b, 0)),   # per-sequence activations
        const_spec(misc),
        const_spec(wqkv),
        const_spec(wo),
        const_spec(w12),
        const_spec(w3),
    ]
    out_spec = pl.BlockSpec((T, EMB), lambda b: (b, 0))

    out = pl.pallas_call(
        transformer_block_kernel,
        out_shape=jax.ShapeDtypeStruct((BT, EMB), F32),
        grid_spec=pltpu.PrefetchScalarGridSpec(
            num_scalar_prefetch=0,
            grid=(B,),                       # independent sequences
            in_specs=in_specs,
            out_specs=out_spec,
        ),
        compiler_params=pltpu.CompilerParams(
            dimension_semantics=("parallel",)),   # shards across v7x's 2 TCs
    )(x_flat, *kparams)
    return out.reshape(B, T, EMB)


# ---------------- deterministic parameter / input construction ----------------
def make_params_and_input():
    key = jax.random.PRNGKey(0)
    ks = jax.random.split(key, 10)

    def init(k, shape, scale=0.05):
        return (jax.random.normal(k, shape, F32) * scale).astype(BF16)

    # Original (module-layout, pre-transposed to in x out) weights.
    wq = init(ks[0], (EMB, EMB))
    wk = init(ks[1], (EMB, N_KV * HD))
    wv = init(ks[2], (EMB, N_KV * HD))
    wo = init(ks[3], (EMB, EMB))
    bo = init(ks[4], (1, EMB))
    w1 = init(ks[5], (EMB, HIDDEN))
    w2 = init(ks[6], (EMB, HIDDEN))
    w3 = init(ks[7], (HIDDEN, EMB))
    n1w = jnp.ones((1, EMB), F32)   # nn.RMSNorm weight init = ones
    n2w = jnp.ones((1, EMB), F32)

    # RoPE tables (theta=10000, no rope_freq scaling in this config).
    theta_idx = jnp.arange(HD // 2, dtype=F32)
    inv_freq = 1.0 / (ROPE_THETA ** (2.0 * theta_idx / HD))
    pos = jnp.arange(CTX, dtype=F32)
    freqs = pos[:, None] * inv_freq[None, :]                 # (CTX, HD/2)
    cos_t = jnp.repeat(jnp.cos(freqs), 2, axis=-1)[:T]       # (T, HD)
    sin_t = jnp.repeat(jnp.sin(freqs), 2, axis=-1)[:T]

    # Pair-swap / sign matrix implementing the interleaved complex rotation.
    rot_np = np.zeros((HD, HD), np.float32)
    for i in range(HD // 2):
        rot_np[2 * i + 1, 2 * i] = -1.0
        rot_np[2 * i, 2 * i + 1] = 1.0
    rot = jnp.asarray(rot_np)
    rot_full = jnp.asarray(np.kron(np.eye(N_HEADS, dtype=np.float32), rot_np))

    # ---- fused / folded kernel weights (all foldings are exact) ----
    rep = N_HEADS // N_KV
    wq_s = (wq.astype(F32) * SCALE).astype(BF16)                     # exact
    wq_r = (wq.astype(F32) @ rot_full * SCALE).astype(BF16)          # exact
    wk_rep = jnp.concatenate(
        [wk[:, (h // rep) * HD:(h // rep + 1) * HD] for h in range(N_HEADS)],
        axis=1)                                                      # (EMB, EMB)
    wv_rep = jnp.concatenate(
        [wv[:, (h // rep) * HD:(h // rep + 1) * HD] for h in range(N_HEADS)],
        axis=1)
    wk_rot = (wk_rep.astype(F32) @ rot_full).astype(BF16)            # exact
    # Column order [q | k | qr | kr | v] so RoPE runs on full 128-lane slabs.
    wqkv = jnp.concatenate([wq_s, wk_rep, wq_r, wk_rot, wv_rep], axis=1)
    w12 = jnp.concatenate([w1, w2], axis=1)                          # (EMB, 2*HID)

    # ---- packed "misc" array: cos/sin slabs + norm weights + proj bias ----
    cos_emb = np.tile(np.asarray(cos_t), (1, N_HEADS))               # (T, EMB)
    sin_emb = np.tile(np.asarray(sin_t), (1, N_HEADS))
    misc = np.zeros((MISC_ROWS, 128), np.float32)
    misc[ROW_COS0:ROW_COS0 + T, 0:EMB] = cos_emb
    misc[ROW_COS0:ROW_COS0 + T, EMB:2 * EMB] = cos_emb
    misc[ROW_SIN0:ROW_SIN0 + T, 0:EMB] = sin_emb
    misc[ROW_SIN0:ROW_SIN0 + T, EMB:2 * EMB] = sin_emb
    misc[ROW_NORM, 0:EMB] = np.asarray(n1w)[0]
    misc[ROW_NORM, EMB:2 * EMB] = np.asarray(n2w)[0]
    misc[ROW_BIAS, 0:EMB] = np.asarray(bo.astype(F32))[0]            # exact cast
    misc = jnp.asarray(misc)

    x = jax.random.normal(ks[8], (B, T, EMB), F32)

    kernel_params = (misc, wqkv, wo, w12, w3)
    ref_params = dict(wq=wq, wk=wk, wv=wv, wo=wo, bo=bo, w1=w1, w2=w2, w3=w3,
                      n1w=n1w, n2w=n2w, cos=cos_t, sin=sin_t, rot=rot)
    return x, kernel_params, ref_params


# ---------------- pure-JAX reference (unfused weights, explicit rot/concat) --
def reference(x, p):
    cos_t, sin_t, rot = p["cos"], p["sin"], p["rot"]
    rep = N_HEADS // N_KV
    causal = jnp.asarray(np.tril(np.ones((T, T), bool)))

    def rope(u):
        return u * cos_t + jnp.dot(u, rot, preferred_element_type=F32) * sin_t

    outs = []
    for b in range(B):
        xb32 = x[b]
        ms = jnp.mean(xb32 * xb32, axis=-1, keepdims=True)
        xb = (xb32 * jax.lax.rsqrt(ms + EPS) * p["n1w"]).astype(BF16)

        q = jnp.dot(xb, p["wq"], preferred_element_type=F32)
        k = jnp.dot(xb, p["wk"], preferred_element_type=F32)
        v = jnp.dot(xb, p["wv"], preferred_element_type=F32)

        k_rot = [rope(k[:, g * HD:(g + 1) * HD]).astype(BF16) for g in range(N_KV)]
        v_grp = [v[:, g * HD:(g + 1) * HD].astype(BF16) for g in range(N_KV)]

        heads = []
        for h in range(N_HEADS):
            g = h // rep
            qh = rope(q[:, h * HD:(h + 1) * HD]).astype(BF16)
            s = jax.lax.dot_general(qh, k_rot[g], (((1,), (1,)), ((), ())),
                                    preferred_element_type=F32) * SCALE
            s = jnp.where(causal, s, NEG)
            m = jnp.max(s, axis=-1, keepdims=True)
            e = jnp.exp(s - m)
            pr = e / jnp.sum(e, axis=-1, keepdims=True)
            oh = jnp.dot(pr.astype(BF16), v_grp[g],
                         preferred_element_type=F32).astype(BF16)
            heads.append(oh)
        attn = jnp.concatenate(heads, axis=-1)
        attn = (jnp.dot(attn, p["wo"], preferred_element_type=F32)
                + p["bo"].astype(F32)).astype(BF16)
        x1 = xb32 + attn.astype(F32)

        ms2 = jnp.mean(x1 * x1, axis=-1, keepdims=True)
        xn2 = (x1 * jax.lax.rsqrt(ms2 + EPS) * p["n2w"]).astype(BF16)
        h1 = jnp.dot(xn2, p["w1"], preferred_element_type=F32)
        h2 = jnp.dot(xn2, p["w2"], preferred_element_type=F32)
        gate = (jax.nn.silu(h1) * h2).astype(BF16)
        ff = jnp.dot(gate, p["w3"], preferred_element_type=F32).astype(BF16)
        outs.append(x1 + ff.astype(F32))
    return jnp.stack(outs, axis=0)


if __name__ == "__main__":
    x, kernel_params, ref_params = make_params_and_input()

    out = transformer_block(x, kernel_params)
    out = jax.block_until_ready(out)

    ref = jax.block_until_ready(reference(x, ref_params))
    assert out.shape == (B, T, EMB) and out.dtype == jnp.float32
    np.testing.assert_allclose(np.asarray(out), np.asarray(ref),
                               rtol=2e-2, atol=2e-2)
    print("KERNEL_OK")
</pallas_src>

<mosaic_0001>
module attributes {stable_mosaic.version = 11 : i64} {
  func.func @transformer_block_kernel(%arg0: i32, %arg1: memref<8x64xf32, #tpu.memory_space<vmem>>, %arg2: memref<18x128xf32, #tpu.memory_space<vmem>>, %arg3: memref<64x320xbf16, #tpu.memory_space<vmem>>, %arg4: memref<64x64xbf16, #tpu.memory_space<vmem>>, %arg5: memref<64x256xbf16, #tpu.memory_space<vmem>>, %arg6: memref<128x64xbf16, #tpu.memory_space<vmem>>, %arg7: memref<8x64xf32, #tpu.memory_space<vmem>>) attributes {dimension_semantics = [#tpu.dimension_semantics<parallel>], iteration_bounds = array<i64: 2>, scalar_prefetch = 0 : i64, scratch_operands = 0 : i64, tpu.core_type = #tpu.core_type<tc>, window_params = [{transform_indices = @transform_0, window_bounds = array<i64: 8, 64>}, {pipeline_mode = #tpu.pipeline_mode<synchronous>, transform_indices = @transform_1, window_bounds = array<i64: 18, 128>}, {pipeline_mode = #tpu.pipeline_mode<synchronous>, transform_indices = @transform_2, window_bounds = array<i64: 64, 320>}, {pipeline_mode = #tpu.pipeline_mode<synchronous>, transform_indices = @transform_3, window_bounds = array<i64: 64, 64>}, {pipeline_mode = #tpu.pipeline_mode<synchronous>, transform_indices = @transform_4, window_bounds = array<i64: 64, 256>}, {pipeline_mode = #tpu.pipeline_mode<synchronous>, transform_indices = @transform_5, window_bounds = array<i64: 128, 64>}, {transform_indices = @transform_6, window_bounds = array<i64: 8, 64>}]} {
    %c0 = arith.constant 0 : index
    %c0_0 = arith.constant 0 : index
    %0 = vector.load %arg1[%c0, %c0_0] : memref<8x64xf32, #tpu.memory_space<vmem>>, vector<8x64xf32>
    %c0_1 = arith.constant 0 : index
    %c0_2 = arith.constant 0 : index
    %1 = vector.load %arg2[%c0_1, %c0_2] : memref<18x128xf32, #tpu.memory_space<vmem>>, vector<18x128xf32>
    %2 = vector.extract_strided_slice %1 {offsets = [0, 0], sizes = [8, 128], strides = [1, 1]} : vector<18x128xf32> to vector<8x128xf32>
    %3 = vector.extract_strided_slice %1 {offsets = [8, 0], sizes = [8, 128], strides = [1, 1]} : vector<18x128xf32> to vector<8x128xf32>
    %4 = vector.extract_strided_slice %1 {offsets = [16, 0], sizes = [1, 64], strides = [1, 1]} : vector<18x128xf32> to vector<1x64xf32>
    %5 = vector.extract_strided_slice %1 {offsets = [16, 64], sizes = [1, 64], strides = [1, 1]} : vector<18x128xf32> to vector<1x64xf32>
    %6 = vector.extract_strided_slice %1 {offsets = [17, 0], sizes = [1, 64], strides = [1, 1]} : vector<18x128xf32> to vector<1x64xf32>
    %7 = arith.mulf %0, %0 : vector<8x64xf32>
    %cst = arith.constant dense<0.000000e+00> : vector<8xf32>
    %8 = vector.multi_reduction <add>, %7, %cst [1] : vector<8x64xf32> to vector<8xf32>
    %9 = vector.shape_cast %8 : vector<8xf32> to vector<8x1xf32>
    %cst_3 = arith.constant 6.400000e+01 : f32
    %10 = vector.broadcast %cst_3 : f32 to vector<8x1xf32>
    %11 = arith.divf %9, %10 : vector<8x1xf32>
    %cst_4 = arith.constant 9.99999974E-6 : f32
    %12 = vector.broadcast %cst_4 : f32 to vector<8x1xf32>
    %13 = arith.addf %11, %12 : vector<8x1xf32>
    %14 = math.rsqrt %13 : vector<8x1xf32>
    %15 = vector.broadcast %14 : vector<8x1xf32> to vector<8x64xf32>
    %16 = arith.mulf %0, %15 : vector<8x64xf32>
    %17 = vector.broadcast %4 : vector<1x64xf32> to vector<8x64xf32>
    %18 = arith.mulf %16, %17 : vector<8x64xf32>
    %19 = arith.truncf %18 : vector<8x64xf32> to vector<8x64xbf16>
    %c0_5 = arith.constant 0 : index
    %c0_6 = arith.constant 0 : index
    %20 = vector.load %arg3[%c0_5, %c0_6] : memref<64x320xbf16, #tpu.memory_space<vmem>>, vector<64x320xbf16>
    %cst_7 = arith.constant dense<0.000000e+00> : vector<8x320xf32>
    %21 = tpu.matmul %19, %20, %cst_7 {dimension_numbers = #tpu.dot_dimension_numbers<[1], [0], [0], [1], [0, 0, 1, 1], [], []>} : vector<8x64xbf16>, vector<64x320xbf16>, vector<8x320xf32> -> vector<8x320xf32>
    %22 = vector.extract_strided_slice %21 {offsets = [0, 0], sizes = [8, 128], strides = [1, 1]} : vector<8x320xf32> to vector<8x128xf32>
    %23 = vector.extract_strided_slice %21 {offsets = [0, 128], sizes = [8, 128], strides = [1, 1]} : vector<8x320xf32> to vector<8x128xf32>
    %24 = vector.extract_strided_slice %21 {offsets = [0, 256], sizes = [8, 64], strides = [1, 1]} : vector<8x320xf32> to vector<8x64xf32>
    %25 = arith.mulf %22, %2 : vector<8x128xf32>
    %26 = arith.mulf %23, %3 : vector<8x128xf32>
    %27 = arith.addf %25, %26 : vector<8x128xf32>
    %28 = vector.extract_strided_slice %27 {offsets = [0, 0], sizes = [8, 64], strides = [1, 1]} : vector<8x128xf32> to vector<8x64xf32>
    %29 = arith.truncf %28 : vector<8x64xf32> to vector<8x64xbf16>
    %30 = vector.extract_strided_slice %27 {offsets = [0, 64], sizes = [8, 64], strides = [1, 1]} : vector<8x128xf32> to vector<8x64xf32>
    %31 = arith.truncf %30 : vector<8x64xf32> to vector<8x64xbf16>
    %32 = arith.truncf %24 : vector<8x64xf32> to vector<8x64xbf16>
    %33 = tpu.iota {dimensions = array<i32: 0>} : vector<8x8xi32>
    %34 = tpu.iota {dimensions = array<i32: 1>} : vector<8x8xi32>
    %35 = arith.cmpi sge, %33, %34 : vector<8x8xi32>
    %cst_8 = arith.constant 0.000000e+00 : f32
    %cst_9 = arith.constant -1.000000e+30 : f32
    %36 = vector.broadcast %cst_8 : f32 to vector<8x8xf32>
    %37 = vector.broadcast %cst_9 : f32 to vector<8x8xf32>
    %38 = arith.select %35, %36, %37 : vector<8x8xi1>, vector<8x8xf32>
    %39 = vector.extract_strided_slice %29 {offsets = [0, 0], sizes = [8, 16], strides = [1, 1]} : vector<8x64xbf16> to vector<8x16xbf16>
    %40 = vector.extract_strided_slice %31 {offsets = [0, 0], sizes = [8, 16], strides = [1, 1]} : vector<8x64xbf16> to vector<8x16xbf16>
    %cst_10 = arith.constant dense<0.000000e+00> : vector<8x8xf32>
    %41 = tpu.matmul %39, %40, %cst_10 {dimension_numbers = #tpu.dot_dimension_numbers<[1], [1], [0], [0], [0, 0, 1, 0], [], []>} : vector<8x16xbf16>, vector<8x16xbf16>, vector<8x8xf32> -> vector<8x8xf32>
    %42 = arith.addf %41, %38 : vector<8x8xf32>
    %cst_11 = arith.constant dense<0xFF800000> : vector<8xf32>
    %43 = vector.multi_reduction <maximumf>, %42, %cst_11 [1] : vector<8x8xf32> to vector<8xf32>
    %44 = vector.shape_cast %43 : vector<8xf32> to vector<8x1xf32>
    %45 = vector.broadcast %44 : vector<8x1xf32> to vector<8x8xf32>
    %46 = arith.subf %42, %45 : vector<8x8xf32>
    %47 = math.exp %46 : vector<8x8xf32>
    %cst_12 = arith.constant dense<0.000000e+00> : vector<8xf32>
    %48 = vector.multi_reduction <add>, %47, %cst_12 [1] : vector<8x8xf32> to vector<8xf32>
    %49 = vector.shape_cast %48 : vector<8xf32> to vector<8x1xf32>
    %50 = tpu.reciprocal %49 {approx = true} : vector<8x1xf32> -> vector<8x1xf32>
    %51 = vector.broadcast %50 : vector<8x1xf32> to vector<8x8xf32>
    %52 = arith.mulf %47, %51 : vector<8x8xf32>
    %53 = arith.truncf %52 : vector<8x8xf32> to vector<8x8xbf16>
    %54 = vector.extract_strided_slice %32 {offsets = [0, 0], sizes = [8, 16], strides = [1, 1]} : vector<8x64xbf16> to vector<8x16xbf16>
    %cst_13 = arith.constant dense<0.000000e+00> : vector<8x16xf32>
    %55 = tpu.matmul %53, %54, %cst_13 {dimension_numbers = #tpu.dot_dimension_numbers<[1], [0], [0], [1], [0, 0, 1, 1], [], []>} : vector<8x8xbf16>, vector<8x16xbf16>, vector<8x16xf32> -> vector<8x16xf32>
    %56 = arith.truncf %55 : vector<8x16xf32> to vector<8x16xbf16>
    %57 = vector.extract_strided_slice %29 {offsets = [0, 16], sizes = [8, 16], strides = [1, 1]} : vector<8x64xbf16> to vector<8x16xbf16>
    %58 = vector.extract_strided_slice %31 {offsets = [0, 16], sizes = [8, 16], strides = [1, 1]} : vector<8x64xbf16> to vector<8x16xbf16>
    %cst_14 = arith.constant dense<0.000000e+00> : vector<8x8xf32>
    %59 = tpu.matmul %57, %58, %cst_14 {dimension_numbers = #tpu.dot_dimension_numbers<[1], [1], [0], [0], [0, 0, 1, 0], [], []>} : vector<8x16xbf16>, vector<8x16xbf16>, vector<8x8xf32> -> vector<8x8xf32>
    %60 = arith.addf %59, %38 : vector<8x8xf32>
    %cst_15 = arith.constant dense<0xFF800000> : vector<8xf32>
    %61 = vector.multi_reduction <maximumf>, %60, %cst_15 [1] : vector<8x8xf32> to vector<8xf32>
    %62 = vector.shape_cast %61 : vector<8xf32> to vector<8x1xf32>
    %63 = vector.broadcast %62 : vector<8x1xf32> to vector<8x8xf32>
    %64 = arith.subf %60, %63 : vector<8x8xf32>
    %65 = math.exp %64 : vector<8x8xf32>
    %cst_16 = arith.constant dense<0.000000e+00> : vector<8xf32>
    %66 = vector.multi_reduction <add>, %65, %cst_16 [1] : vector<8x8xf32> to vector<8xf32>
    %67 = vector.shape_cast %66 : vector<8xf32> to vector<8x1xf32>
    %68 = tpu.reciprocal %67 {approx = true} : vector<8x1xf32> -> vector<8x1xf32>
    %69 = vector.broadcast %68 : vector<8x1xf32> to vector<8x8xf32>
    %70 = arith.mulf %65, %69 : vector<8x8xf32>
    %71 = arith.truncf %70 : vector<8x8xf32> to vector<8x8xbf16>
    %72 = vector.extract_strided_slice %32 {offsets = [0, 16], sizes = [8, 16], strides = [1, 1]} : vector<8x64xbf16> to vector<8x16xbf16>
    %cst_17 = arith.constant dense<0.000000e+00> : vector<8x16xf32>
    %73 = tpu.matmul %71, %72, %cst_17 {dimension_numbers = #tpu.dot_dimension_numbers<[1], [0], [0], [1], [0, 0, 1, 1], [], []>} : vector<8x8xbf16>, vector<8x16xbf16>, vector<8x16xf32> -> vector<8x16xf32>
    %74 = arith.truncf %73 : vector<8x16xf32> to vector<8x16xbf16>
    %75 = vector.extract_strided_slice %29 {offsets = [0, 32], sizes = [8, 16], strides = [1, 1]} : vector<8x64xbf16> to vector<8x16xbf16>
    %76 = vector.extract_strided_slice %31 {offsets = [0, 32], sizes = [8, 16], strides = [1, 1]} : vector<8x64xbf16> to vector<8x16xbf16>
    %cst_18 = arith.constant dense<0.000000e+00> : vector<8x8xf32>
    %77 = tpu.matmul %75, %76, %cst_18 {dimension_numbers = #tpu.dot_dimension_numbers<[1], [1], [0], [0], [0, 0, 1, 0], [], []>} : vector<8x16xbf16>, vector<8x16xbf16>, vector<8x8xf32> -> vector<8x8xf32>
    %78 = arith.addf %77, %38 : vector<8x8xf32>
    %cst_19 = arith.constant dense<0xFF800000> : vector<8xf32>
    %79 = vector.multi_reduction <maximumf>, %78, %cst_19 [1] : vector<8x8xf32> to vector<8xf32>
    %80 = vector.shape_cast %79 : vector<8xf32> to vector<8x1xf32>
    %81 = vector.broadcast %80 : vector<8x1xf32> to vector<8x8xf32>
    %82 = arith.subf %78, %81 : vector<8x8xf32>
    %83 = math.exp %82 : vector<8x8xf32>
    %cst_20 = arith.constant dense<0.000000e+00> : vector<8xf32>
    %84 = vector.multi_reduction <add>, %83, %cst_20 [1] : vector<8x8xf32> to vector<8xf32>
    %85 = vector.shape_cast %84 : vector<8xf32> to vector<8x1xf32>
    %86 = tpu.reciprocal %85 {approx = true} : vector<8x1xf32> -> vector<8x1xf32>
    %87 = vector.broadcast %86 : vector<8x1xf32> to vector<8x8xf32>
    %88 = arith.mulf %83, %87 : vector<8x8xf32>
    %89 = arith.truncf %88 : vector<8x8xf32> to vector<8x8xbf16>
    %90 = vector.extract_strided_slice %32 {offsets = [0, 32], sizes = [8, 16], strides = [1, 1]} : vector<8x64xbf16> to vector<8x16xbf16>
    %cst_21 = arith.constant dense<0.000000e+00> : vector<8x16xf32>
    %91 = tpu.matmul %89, %90, %cst_21 {dimension_numbers = #tpu.dot_dimension_numbers<[1], [0], [0], [1], [0, 0, 1, 1], [], []>} : vector<8x8xbf16>, vector<8x16xbf16>, vector<8x16xf32> -> vector<8x16xf32>
    %92 = arith.truncf %91 : vector<8x16xf32> to vector<8x16xbf16>
    %93 = vector.extract_strided_slice %29 {offsets = [0, 48], sizes = [8, 16], strides = [1, 1]} : vector<8x64xbf16> to vector<8x16xbf16>
    %94 = vector.extract_strided_slice %31 {offsets = [0, 48], sizes = [8, 16], strides = [1, 1]} : vector<8x64xbf16> to vector<8x16xbf16>
    %cst_22 = arith.constant dense<0.000000e+00> : vector<8x8xf32>
    %95 = tpu.matmul %93, %94, %cst_22 {dimension_numbers = #tpu.dot_dimension_numbers<[1], [1], [0], [0], [0, 0, 1, 0], [], []>} : vector<8x16xbf16>, vector<8x16xbf16>, vector<8x8xf32> -> vector<8x8xf32>
    %96 = arith.addf %95, %38 : vector<8x8xf32>
    %cst_23 = arith.constant dense<0xFF800000> : vector<8xf32>
    %97 = vector.multi_reduction <maximumf>, %96, %cst_23 [1] : vector<8x8xf32> to vector<8xf32>
    %98 = vector.shape_cast %97 : vector<8xf32> to vector<8x1xf32>
    %99 = vector.broadcast %98 : vector<8x1xf32> to vector<8x8xf32>
    %100 = arith.subf %96, %99 : vector<8x8xf32>
    %101 = math.exp %100 : vector<8x8xf32>
    %cst_24 = arith.constant dense<0.000000e+00> : vector<8xf32>
    %102 = vector.multi_reduction <add>, %101, %cst_24 [1] : vector<8x8xf32> to vector<8xf32>
    %103 = vector.shape_cast %102 : vector<8xf32> to vector<8x1xf32>
    %104 = tpu.reciprocal %103 {approx = true} : vector<8x1xf32> -> vector<8x1xf32>
    %105 = vector.broadcast %104 : vector<8x1xf32> to vector<8x8xf32>
    %106 = arith.mulf %101, %105 : vector<8x8xf32>
    %107 = arith.truncf %106 : vector<8x8xf32> to vector<8x8xbf16>
    %108 = vector.extract_strided_slice %32 {offsets = [0, 48], sizes = [8, 16], strides = [1, 1]} : vector<8x64xbf16> to vector<8x16xbf16>
    %cst_25 = arith.constant dense<0.000000e+00> : vector<8x16xf32>
    %109 = tpu.matmul %107, %108, %cst_25 {dimension_numbers = #tpu.dot_dimension_numbers<[1], [0], [0], [1], [0, 0, 1, 1], [], []>} : vector<8x8xbf16>, vector<8x16xbf16>, vector<8x16xf32> -> vector<8x16xf32>
    %110 = arith.truncf %109 : vector<8x16xf32> to vector<8x16xbf16>
    %111 = tpu.concatenate %56, %74, %92, %110 in 1 : vector<8x16xbf16>, vector<8x16xbf16>, vector<8x16xbf16>, vector<8x16xbf16> -> vector<8x64xbf16>
    %c0_26 = arith.constant 0 : index
    %c0_27 = arith.constant 0 : index
    %112 = vector.load %arg4[%c0_26, %c0_27] : memref<64x64xbf16, #tpu.memory_space<vmem>>, vector<64x64xbf16>
    %cst_28 = arith.constant dense<0.000000e+00> : vector<8x64xf32>
    %113 = tpu.matmul %111, %112, %cst_28 {dimension_numbers = #tpu.dot_dimension_numbers<[1], [0], [0], [1], [0, 0, 1, 1], [], []>} : vector<8x64xbf16>, vector<64x64xbf16>, vector<8x64xf32> -> vector<8x64xf32>
    %114 = vector.broadcast %6 : vector<1x64xf32> to vector<8x64xf32>
    %115 = arith.addf %113, %114 : vector<8x64xf32>
    %116 = arith.truncf %115 : vector<8x64xf32> to vector<8x64xbf16>
    %117 = arith.extf %116 : vector<8x64xbf16> to vector<8x64xf32>
    %118 = arith.addf %0, %117 : vector<8x64xf32>
    %119 = arith.mulf %118, %118 : vector<8x64xf32>
    %cst_29 = arith.constant dense<0.000000e+00> : vector<8xf32>
    %120 = vector.multi_reduction <add>, %119, %cst_29 [1] : vector<8x64xf32> to vector<8xf32>
    %121 = vector.shape_cast %120 : vector<8xf32> to vector<8x1xf32>
    %cst_30 = arith.constant 6.400000e+01 : f32
    %122 = vector.broadcast %cst_30 : f32 to vector<8x1xf32>
    %123 = arith.divf %121, %122 : vector<8x1xf32>
    %cst_31 = arith.constant 9.99999974E-6 : f32
    %124 = vector.broadcast %cst_31 : f32 to vector<8x1xf32>
    %125 = arith.addf %123, %124 : vector<8x1xf32>
    %126 = math.rsqrt %125 : vector<8x1xf32>
    %127 = vector.broadcast %126 : vector<8x1xf32> to vector<8x64xf32>
    %128 = arith.mulf %118, %127 : vector<8x64xf32>
    %129 = vector.broadcast %5 : vector<1x64xf32> to vector<8x64xf32>
    %130 = arith.mulf %128, %129 : vector<8x64xf32>
    %131 = arith.truncf %130 : vector<8x64xf32> to vector<8x64xbf16>
    %c0_32 = arith.constant 0 : index
    %c0_33 = arith.constant 0 : index
    %132 = vector.load %arg5[%c0_32, %c0_33] : memref<64x256xbf16, #tpu.memory_space<vmem>>, vector<64x256xbf16>
    %cst_34 = arith.constant dense<0.000000e+00> : vector<8x256xf32>
    %133 = tpu.matmul %131, %132, %cst_34 {dimension_numbers = #tpu.dot_dimension_numbers<[1], [0], [0], [1], [0, 0, 1, 1], [], []>} : vector<8x64xbf16>, vector<64x256xbf16>, vector<8x256xf32> -> vector<8x256xf32>
    %134 = vector.extract_strided_slice %133 {offsets = [0, 0], sizes = [8, 128], strides = [1, 1]} : vector<8x256xf32> to vector<8x128xf32>
    %135 = arith.negf %134 : vector<8x128xf32>
    %136 = math.exp %135 : vector<8x128xf32>
    %cst_35 = arith.constant 1.000000e+00 : f32
    %137 = vector.broadcast %cst_35 : f32 to vector<8x128xf32>
    %138 = arith.addf %137, %136 : vector<8x128xf32>
    %139 = arith.divf %137, %138 : vector<8x128xf32>
    %140 = arith.mulf %134, %139 : vector<8x128xf32>
    %141 = vector.extract_strided_slice %133 {offsets = [0, 128], sizes = [8, 128], strides = [1, 1]} : vector<8x256xf32> to vector<8x128xf32>
    %142 = arith.mulf %140, %141 : vector<8x128xf32>
    %143 = arith.truncf %142 : vector<8x128xf32> to vector<8x128xbf16>
    %c0_36 = arith.constant 0 : index
    %c0_37 = arith.constant 0 : index
    %144 = vector.load %arg6[%c0_36, %c0_37] : memref<128x64xbf16, #tpu.memory_space<vmem>>, vector<128x64xbf16>
    %cst_38 = arith.constant dense<0.000000e+00> : vector<8x64xf32>
    %145 = tpu.matmul %143, %144, %cst_38 {dimension_numbers = #tpu.dot_dimension_numbers<[1], [0], [0], [1], [0, 0, 1, 1], [], []>} : vector<8x128xbf16>, vector<128x64xbf16>, vector<8x64xf32> -> vector<8x64xf32>
    %146 = arith.truncf %145 : vector<8x64xf32> to vector<8x64xbf16>
    %147 = arith.extf %146 : vector<8x64xbf16> to vector<8x64xf32>
    %148 = arith.addf %118, %147 : vector<8x64xf32>
    %c0_39 = arith.constant 0 : index
    %c0_40 = arith.constant 0 : index
    %149 = vector.load %arg7[%c0_39, %c0_40] : memref<8x64xf32, #tpu.memory_space<vmem>>, vector<8x64xf32>
    tpu.vector_store %arg7[%c0_39, %c0_40], %148 {strides = array<i32>} : memref<8x64xf32, #tpu.memory_space<vmem>>, vector<8x64xf32>,
    return
  }
  func.func @transform_0(%arg0: i32) -> (i32, i32) {
    %c0_i32 = arith.constant 0 : i32
    %c0_i32_0 = arith.constant 0 : i32
    return %arg0, %c0_i32 : i32, i32
  }
  func.func @transform_1(%arg0: i32) -> (i32, i32) {
    %c0_i32 = arith.constant 0 : i32
    %c0_i32_0 = arith.constant 0 : i32
    %c0_i32_1 = arith.constant 0 : i32
    return %c0_i32, %c0_i32_0 : i32, i32
  }
  func.func @transform_2(%arg0: i32) -> (i32, i32) {
    %c0_i32 = arith.constant 0 : i32
    %c0_i32_0 = arith.constant 0 : i32
    %c0_i32_1 = arith.constant 0 : i32
    return %c0_i32, %c0_i32_0 : i32, i32
  }
  func.func @transform_3(%arg0: i32) -> (i32, i32) {
    %c0_i32 = arith.constant 0 : i32
    %c0_i32_0 = arith.constant 0 : i32
    %c0_i32_1 = arith.constant 0 : i32
    return %c0_i32, %c0_i32_0 : i32, i32
  }
  func.func @transform_4(%arg0: i32) -> (i32, i32) {
    %c0_i32 = arith.constant 0 : i32
    %c0_i32_0 = arith.constant 0 : i32
    %c0_i32_1 = arith.constant 0 : i32
    return %c0_i32, %c0_i32_0 : i32, i32
  }
  func.func @transform_5(%arg0: i32) -> (i32, i32) {
    %c0_i32 = arith.constant 0 : i32
    %c0_i32_0 = arith.constant 0 : i32
    %c0_i32_1 = arith.constant 0 : i32
    return %c0_i32, %c0_i32_0 : i32, i32
  }
  func.func @transform_6(%arg0: i32) -> (i32, i32) {
    %c0_i32 = arith.constant 0 : i32
    %c0_i32_0 = arith.constant 0 : i32
    return %arg0, %c0_i32 : i32, i32
  }
}

</mosaic_0001>

<llo_original>
// kernel: tpu_custom_call.1
$region0: #{tpu_custom_call.1}
  #allocation0 [shape = 'u32[]', space=smem, size = 0x4, offset = 0x4, fixed_abs, tag = 'smem constant byte address 0x4 - core index']
  #allocation1 [shape = 'u32[144,128]{1,0:T(1,128)}', space=vmem, size = 0x12000, scoped, tag = 'internal scratch']
  %s0 = inlined_call_operand.hbm [shape: f32[16,64], index: 0, kind: input, shape index: {}]
  %s1 = inlined_call_operand.hbm [shape: f32[18,128], index: 1, kind: input, shape index: {}]
  %s2 = inlined_call_operand.vmem [shape: bf16[64,320], index: 2, kind: input, shape index: {}]
  %s3 = inlined_call_operand.hbm [shape: bf16[64,64], index: 3, kind: input, shape index: {}]
  %s4 = inlined_call_operand.hbm [shape: bf16[64,256], index: 4, kind: input, shape index: {}]
  %s5 = inlined_call_operand.vmem [shape: bf16[128,64], index: 5, kind: input, shape index: {}]
  %s6 = inlined_call_operand.hbm [shape: f32[16,64], index: 6, kind: output, shape index: {}]
  %s7 = sld [smem:[#allocation0]]
  $region73: #{tpu_custom_call.1} parent=0
    _
  %s9 = ssub.s32 1, %s7
  %s10 = scalar_select 0, %s9, %s7
  $region1: #{tpu_custom_call.1} parent=0
    #allocation2 [shape = 'u8[8192]{0}', space=vmem, size = 0x2000, scoped, tag = 'input window, operand 0']
    #allocation3 [shape = 's32[2]{0}', space=sflag, size = 0x8, scoped, tag = 'scoped memory for tpu_custom_call.1']
    #allocation4 [shape = 's32[2]{0}', space=sflag, size = 0x8, scoped, tag = 'scoped memory for tpu_custom_call.1']
    #allocation5 [shape = 'u8[12288]{0}', space=vmem, size = 0x3000, scoped, tag = 'input window, operand 1, single buffered']
    #allocation6 [shape = 's32[1]{0}', space=sflag, size = 0x4, scoped, tag = 'scoped memory for tpu_custom_call.1']
    #allocation7 [shape = 'u8[16384]{0}', space=vmem, size = 0x4000, scoped, tag = 'input window, operand 3, single buffered']
    #allocation8 [shape = 'u8[32768]{0}', space=vmem, size = 0x8000, scoped, tag = 'input window, operand 4, single buffered']
    #allocation9 [shape = 's32[1]{0}', space=sflag, size = 0x4, scoped, tag = 'scoped memory for tpu_custom_call.1']
    #allocation10 [shape = 'u8[8192]{0}', space=vmem, size = 0x2000, scoped, tag = 'output window, operand 0']
    %11 = vsyncpa [#allocation3], 0
    %s12 = scalar_lea.sflag [#allocation3], 1
    %13 = vsyncpa %s12, 0
    %14 = vsyncpa [#allocation6], 0
    %15 = vsyncpa [#allocation9], 0
    %16 = vsyncpa [#allocation4], 0
    %s17 = scalar_lea.sflag [#allocation4], 1
    %18 = vsyncpa %s17, 0
    loop: start=0, step=1, limit=4
    $region2: #{tpu_custom_call.1} parent=1 // loop_pre_header
      _
    $region3: #{tpu_custom_call.1} parent=1 // loop_header
      %s20 = sphi 0, %s24
      %p21 = scmp.ge.s32.totalorder %s20, 4
      %s30 = sphi 0, %s32
      %s33 = sphi 0, %s30
      %s34 = sphi 0, %s33
      %s50 = sphi 0, %s34
      %s54 = sphi 0, %s54
      %s56 = sphi 0, %s54
      %s57 = sphi 0, %s56
      %s71 = sphi 0, %s57
      %s75 = sphi 0, %s75
      %s77 = sphi 0, %s75
      %s78 = sphi 0, %s77
      %s92 = sphi 0, %s78
      %s96 = sphi 0, %s96
      %s98 = sphi 0, %s96
      %s99 = sphi 0, %s98
      %s113 = sphi 0, %s99
      %s117 = sphi 0, %s117
      %s119 = sphi 0, %s117
      %s120 = sphi 0, %s119
      %s134 = sphi 0, %s120
      %s138 = sphi 0, %s138
      %s140 = sphi 0, %s138
      %s141 = sphi 0, %s140
      %s155 = sphi 0, %s141
      %s161 = sphi 0, %s163
      %s164 = sphi 0, %s161
      %s165 = sphi 0, %s164
      %s181 = sphi 0, %s165
    $region4: #{tpu_custom_call.1} parent=1 // loop_header_branch
      %23 = sbr.rel (%p21) target = $region8
    $region5: #{tpu_custom_call.1} parent=1 // loop_body
      %s25 = ssub.s32 %s20, 1
      %s26 = ssub.s32 %s20, 2
      %s27 = sadd.s32 %s20, 1
      %s28 = ssub.s32 %s20, %s27
      %p29 = scmp.eq.s32.totalorder %s28, 0
      %s31 = sadd.s32 %s30, 1
      %s32 = scalar_select %p29, %s30, %s31
      %p35 = pneg %p29
      %p36 = scmp.eq.s32.totalorder %s20, 1
      %p37 = por %p35, %p36
      %p38 = scmp.ne.s32.totalorder %s30, %s33
      %p39 = scmp.eq.s32.totalorder %s20, 0
      %p40 = por %p38, %p39
      %p41 = scmp.ne.s32.totalorder %s30, %s33
      %p42 = scmp.eq.s32.totalorder %s25, 1
      %p43 = por %p41, %p42
      %p44 = scmp.ne.s32.totalorder %s33, %s34
      %p45 = scmp.eq.s32.totalorder %s25, 0
      %p46 = por %p44, %p45
      %p47 = scmp.ne.s32.totalorder %s33, %s34
      %p48 = scmp.eq.s32.totalorder %s26, 1
      %p49 = por %p47, %p48
      %p51 = scmp.ne.s32.totalorder %s34, %s50
      %p52 = scmp.eq.s32.totalorder %s26, 0
      %p53 = por %p51, %p52
      %s55 = sadd.s32 %s54, 1
      %p58 = scmp.eq.s32.totalorder %s20, 1
      %p59 = scmp.ne.s32.totalorder %s54, %s56
      %p60 = scmp.eq.s32.totalorder %s20, 0
      %p61 = por %p59, %p60
      %p62 = scmp.ne.s32.totalorder %s54, %s56
      %p63 = scmp.eq.s32.totalorder %s25, 1
      %p64 = por %p62, %p63
      %p65 = scmp.ne.s32.totalorder %s56, %s57
      %p66 = scmp.eq.s32.totalorder %s25, 0
      %p67 = por %p65, %p66
      %p68 = scmp.ne.s32.totalorder %s56, %s57
      %p69 = scmp.eq.s32.totalorder %s26, 1
      %p70 = por %p68, %p69
      %p72 = scmp.ne.s32.totalorder %s57, %s71
      %p73 = scmp.eq.s32.totalorder %s26, 0
      %p74 = por %p72, %p73
      %s76 = sadd.s32 %s75, 1
      %p79 = scmp.eq.s32.totalorder %s20, 1
      %p80 = scmp.ne.s32.totalorder %s75, %s77
      %p81 = scmp.eq.s32.totalorder %s20, 0
      %p82 = por %p80, %p81
      %p83 = scmp.ne.s32.totalorder %s75, %s77
      %p84 = scmp.eq.s32.totalorder %s25, 1
      %p85 = por %p83, %p84
      %p86 = scmp.ne.s32.totalorder %s77, %s78
      %p87 = scmp.eq.s32.totalorder %s25, 0
      %p88 = por %p86, %p87
      %p89 = scmp.ne.s32.totalorder %s77, %s78
      %p90 = scmp.eq.s32.totalorder %s26, 1
      %p91 = por %p89, %p90
      %p93 = scmp.ne.s32.totalorder %s78, %s92
      %p94 = scmp.eq.s32.totalorder %s26, 0
      %p95 = por %p93, %p94
      %s97 = sadd.s32 %s96, 1
      %p100 = scmp.eq.s32.totalorder %s20, 1
      %p101 = scmp.ne.s32.totalorder %s96, %s98
      %p102 = scmp.eq.s32.totalorder %s20, 0
      %p103 = por %p101, %p102
      %p104 = scmp.ne.s32.totalorder %s96, %s98
      %p105 = scmp.eq.s32.totalorder %s25, 1
      %p106 = por %p104, %p105
      %p107 = scmp.ne.s32.totalorder %s98, %s99
      %p108 = scmp.eq.s32.totalorder %s25, 0
      %p109 = por %p107, %p108
      %p110 = scmp.ne.s32.totalorder %s98, %s99
      %p111 = scmp.eq.s32.totalorder %s26, 1
      %p112 = por %p110, %p111
      %p114 = scmp.ne.s32.totalorder %s99, %s113
      %p115 = scmp.eq.s32.totalorder %s26, 0
      %p116 = por %p114, %p115
      %s118 = sadd.s32 %s117, 1
      %p121 = scmp.eq.s32.totalorder %s20, 1
      %p122 = scmp.ne.s32.totalorder %s117, %s119
      %p123 = scmp.eq.s32.totalorder %s20, 0
      %p124 = por %p122, %p123
      %p125 = scmp.ne.s32.totalorder %s117, %s119
      %p126 = scmp.eq.s32.totalorder %s25, 1
      %p127 = por %p125, %p126
      %p128 = scmp.ne.s32.totalorder %s119, %s120
      %p129 = scmp.eq.s32.totalorder %s25, 0
      %p130 = por %p128, %p129
      %p131 = scmp.ne.s32.totalorder %s119, %s120
      %p132 = scmp.eq.s32.totalorder %s26, 1
      %p133 = por %p131, %p132
      %p135 = scmp.ne.s32.totalorder %s120, %s134
      %p136 = scmp.eq.s32.totalorder %s26, 0
      %p137 = por %p135, %p136
      %s139 = sadd.s32 %s138, 1
      %p142 = scmp.eq.s32.totalorder %s20, 1
      %p143 = scmp.ne.s32.totalorder %s138, %s140
      %p144 = scmp.eq.s32.totalorder %s20, 0
      %p145 = por %p143, %p144
      %p146 = scmp.ne.s32.totalorder %s138, %s140
      %p147 = scmp.eq.s32.totalorder %s25, 1
      %p148 = por %p146, %p147
      %p149 = scmp.ne.s32.totalorder %s140, %s141
      %p150 = scmp.eq.s32.totalorder %s25, 0
      %p151 = por %p149, %p150
      %p152 = scmp.ne.s32.totalorder %s140, %s141
      %p153 = scmp.eq.s32.totalorder %s26, 1
      %p154 = por %p152, %p153
      %p156 = scmp.ne.s32.totalorder %s141, %s155
      %p157 = scmp.eq.s32.totalorder %s26, 0
      %p158 = por %p156, %p157
      %s159 = ssub.s32 %s20, %s27
      %p160 = scmp.eq.s32.totalorder %s159, 0
      %s162 = sadd.s32 %s161, 1
      %s163 = scalar_select %p160, %s161, %s162
      %p166 = pneg %p160
      %p167 = scmp.eq.s32.totalorder %s20, 1
      %p168 = por %p166, %p167
      %p169 = scmp.ne.s32.totalorder %s161, %s164
      %p170 = scmp.eq.s32.totalorder %s20, 0
      %p171 = por %p169, %p170
      %p172 = scmp.ne.s32.totalorder %s161, %s164
      %p173 = scmp.eq.s32.totalorder %s25, 1
      %p174 = por %p172, %p173
      %p175 = scmp.ne.s32.totalorder %s164, %s165
      %p176 = scmp.eq.s32.totalorder %s25, 0
      %p177 = por %p175, %p176
      %p178 = scmp.ne.s32.totalorder %s164, %s165
      %p179 = scmp.eq.s32.totalorder %s26, 1
      %p180 = por %p178, %p179
      %p182 = scmp.ne.s32.totalorder %s165, %s181
      %p183 = scmp.eq.s32.totalorder %s26, 0
      %p184 = por %p182, %p183
      %p185 = scmp.le.s32.totalorder 1, %s20
      %p186 = scmp.lt.s32.totalorder %s20, 3
      %p187 = pnand %p185, %p186
      %p188 = pneg %p187
      // Predicated region
      $region9: #{tpu_custom_call.1} parent=5 // pred_check
        _
      $region10: #{tpu_custom_call.1} parent=5 // pred_check_branch
        %190 = sbr.rel (%p187) target = $region12
      $region11: #{tpu_custom_call.1} parent=5 // pred_region
        %s191 = ssub.s32 %s20, 1
        // Predicated region
        $region13: #{tpu_custom_call.1} parent=11 // pred_check
          %p192 = pneg %p67
        $region14: #{tpu_custom_call.1} parent=11 // pred_check_branch
          %194 = sbr.rel (%p192) target = $region16
        $region15: #{tpu_custom_call.1} parent=11 // pred_region
          %s196 = ssub.s32 384, 384
          %197 = vsyncadd [#allocation6], %s196
          %s198 = sshll.u32 [#allocation5], 4
          %s199 = int_to_ptr.vmem [resolvable:$true] %s198
          %204 = dma.hbm_to_vmem [thread:$0]  %s1, 384, %s199, [#allocation6], 128, 128, 8
        $region16: #{tpu_custom_call.1} parent=11 // pred_fallthru
          _
        // Predicated region
        $region17: #{tpu_custom_call.1} parent=11 // pred_check
          %p205 = pneg %p88
        $region18: #{tpu_custom_call.1} parent=11 // pred_check_branch
          %207 = sbr.rel (%p205) target = $region20
        $region19: #{tpu_custom_call.1} parent=11 // pred_region
          _
        $region20: #{tpu_custom_call.1} parent=11 // pred_fallthru
          _
        // Predicated region
        $region21: #{tpu_custom_call.1} parent=11 // pred_check
          %p208 = pneg %p109
        $region22: #{tpu_custom_call.1} parent=11 // pred_check_branch
          %210 = sbr.rel (%p208) target = $region24
        $region23: #{tpu_custom_call.1} parent=11 // pred_region
          %s212 = ssub.s32 512, 512
          %213 = vsyncadd [#allocation6], %s212
          %s214 = sshll.u32 [#allocation7], 4
          %s215 = int_to_ptr.vmem [resolvable:$true] %s214
          %220 = dma.hbm_to_vmem [thread:$0]  %s3, 512, %s215, [#allocation6], 64, 64, 4
        $region24: #{tpu_custom_call.1} parent=11 // pred_fallthru
          _
        // Predicated region
        $region25: #{tpu_custom_call.1} parent=11 // pred_check
          %p221 = pneg %p130
        $region26: #{tpu_custom_call.1} parent=11 // pred_check_branch
          %223 = sbr.rel (%p221) target = $region28
        $region27: #{tpu_custom_call.1} parent=11 // pred_region
          %s225 = ssub.s32 1024, 1024
          %226 = vsyncadd [#allocation9], %s225
          %s227 = sshll.u32 [#allocation8], 4
          %s228 = int_to_ptr.vmem [resolvable:$true] %s227
          %233 = dma.hbm_to_vmem [thread:$0]  %s4, 1024, %s228, [#allocation9], 128, 128, 8
        $region28: #{tpu_custom_call.1} parent=11 // pred_fallthru
          _
        // Predicated region
        $region29: #{tpu_custom_call.1} parent=11 // pred_check
          %p234 = pneg %p151
        $region30: #{tpu_custom_call.1} parent=11 // pred_check_branch
          %236 = sbr.rel (%p234) target = $region32
        $region31: #{tpu_custom_call.1} parent=11 // pred_region
          _
        $region32: #{tpu_custom_call.1} parent=11 // pred_fallthru
          _
      $region12: #{tpu_custom_call.1} parent=5 // pred_fallthru
        _
      %p237 = scmp.lt.s32.totalorder %s20, 2
      // Predicated region
      $region33: #{tpu_custom_call.1} parent=5 // pred_check
        %p238 = pneg %p237
      $region34: #{tpu_custom_call.1} parent=5 // pred_check_branch
        %240 = sbr.rel (%p238) target = $region36
      $region35: #{tpu_custom_call.1} parent=5 // pred_region
        // Predicated region
        $region37: #{tpu_custom_call.1} parent=35 // pred_check
          %p241 = pneg %p40
        $region38: #{tpu_custom_call.1} parent=35 // pred_check_branch
          %243 = sbr.rel (%p241) target = $region40
        $region39: #{tpu_custom_call.1} parent=35 // pred_region
          %s244 = sand.u32 %s30, 1
          %s245 = scalar_lea.sflag [#allocation3], %s244
          %s246 = sand.u32 %s30, 1
          %s247 = smul.addr %s246, 8
          %s248 = scalar_lea.vmem [#allocation2], %s247
          %s250 = ssub.s32 128, 128
          %251 = vsyncadd %s245, %s250
          %s252 = smul.addr %s20, 128
          %s253 = scalar_lea.hbm %s0, %s252
          %s255 = sshll.u32 %s248, 4
          %s256 = int_to_ptr.vmem [resolvable:$true] %s255
          %258 = dma.hbm_to_vmem [thread:$0]  %s253, 128, %s256, %s245
        $region40: #{tpu_custom_call.1} parent=35 // pred_fallthru
          _
      $region36: #{tpu_custom_call.1} parent=5 // pred_fallthru
        _
      %p259 = scmp.le.s32.totalorder 1, %s20
      %p260 = scmp.lt.s32.totalorder %s20, 3
      %p261 = pnand %p259, %p260
      %p262 = pneg %p261
      // Predicated region
      $region41: #{tpu_custom_call.1} parent=5 // pred_check
        _
      $region42: #{tpu_custom_call.1} parent=5 // pred_check_branch
        %264 = sbr.rel (%p261) target = $region44
      $region43: #{tpu_custom_call.1} parent=5 // pred_region
        %s265 = ssub.s32 %s20, 1
        %s266 = sand.u32 %s33, 1
        %s267 = scalar_lea.sflag [#allocation3], %s266
        %s268 = sand.u32 %s33, 1
        %s269 = smul.addr %s268, 8
        %s270 = scalar_lea.vmem [#allocation2], %s269
        // Predicated region
        $region45: #{tpu_custom_call.1} parent=43 // pred_check
          %p271 = pneg %p46
        $region46: #{tpu_custom_call.1} parent=43 // pred_check_branch
          %273 = sbr.rel (%p271) target = $region48
        $region47: #{tpu_custom_call.1} parent=43 // pred_region
          %274 = dma.done %s267, 128
        $region48: #{tpu_custom_call.1} parent=43 // pred_fallthru
          _
        // Predicated region
        $region49: #{tpu_custom_call.1} parent=43 // pred_check
          %p275 = pneg %p67
        $region50: #{tpu_custom_call.1} parent=43 // pred_check_branch
          %277 = sbr.rel (%p275) target = $region52
        $region51: #{tpu_custom_call.1} parent=43 // pred_region
          %278 = dma.done [#allocation6], 384
        $region52: #{tpu_custom_call.1} parent=43 // pred_fallthru
          _
        // Predicated region
        $region53: #{tpu_custom_call.1} parent=43 // pred_check
          %p279 = pneg %p109
        $region54: #{tpu_custom_call.1} parent=43 // pred_check_branch
          %281 = sbr.rel (%p279) target = $region56
        $region55: #{tpu_custom_call.1} parent=43 // pred_region
          %282 = dma.done [#allocation6], 512
        $region56: #{tpu_custom_call.1} parent=43 // pred_fallthru
          _
        // Predicated region
        $region57: #{tpu_custom_call.1} parent=43 // pred_check
          %p283 = pneg %p130
        $region58: #{tpu_custom_call.1} parent=43 // pred_check_branch
          %285 = sbr.rel (%p283) target = $region60
        $region59: #{tpu_custom_call.1} parent=43 // pred_region
          %286 = dma.done [#allocation9], 1024
        $region60: #{tpu_custom_call.1} parent=43 // pred_fallthru
          _
        %s287 = sand.u32 %s33, 1
        %s288 = scalar_lea.sflag [#allocation3], %s287
        %s289 = sand.u32 %s33, 1
        %s290 = smul.addr %s289, 8
        %s291 = scalar_lea.vmem [#allocation2], %s290
        %p292 = pneg %p46
        %p293 = pneg %p43
        %p294 = pneg %p67
        %p295 = pneg %p64
        %p296 = pneg %p88
        %p297 = pneg %p85
        %p298 = pneg %p109
        %p299 = pneg %p106
        %p300 = pneg %p130
        %p301 = pneg %p127
        %p302 = pneg %p151
        %p303 = pneg %p148
        %p304 = pneg %p177
        %p305 = pneg %p174
        %s306 = sand.u32 %s164, 1
        %s307 = scalar_lea.sflag [#allocation4], %s306
        %s308 = sand.u32 %s164, 1
        %s309 = smul.addr %s308, 8
        %s310 = scalar_lea.vmem [#allocation10], %s309
        %v312 = vld [vmem:[%s270] sm:$0xff]
        %v313 = vld [vmem:[#allocation5] sm:$0xff]
        %v314 = vld [vmem:[#allocation5 + $0x8] sm:$0xff]
        %v315 = vld [vmem:[#allocation5 + $0x10] sm:$0x3]
        %v316 = vmul.f32 %v312, %v312
        %vm317 = vcmask 523264
        %v318 = vsel %vm317, %v316, 0.0
        %319 = vadd.xlane.f32.xlu0 %v318
        %v320 = vpop.xlane.xlu0 %319
        %v321 = vrcp.pop 64.0
        %v322 = vmul.f32 %v320, %v321
        %v323 = vadd.f32 %v322, 1e-05
        %v324 = vrsqrt.pop %v323
        %v325 = vmul.f32 %v312, %v324
        %v326 = vlaneseq
        %v327 = vshrl.u32 %v326, 7
        %v328 = vsub.s32 0, %v327
        %v329 = vrot.slane %v315, %v328
        %v330 = vmul.f32 %v325, %v329
        %v331 = vpack.c.bf16 %v330, %v330
        %v332 = vld [vmem:[%s2] sm:$0xff]
        %v333 = vld [vmem:[%s2 + $0x8] sm:$0xf]
        %v334 = vld [vmem:[%s2 + $0xc] sm:$0xff]
        %v335 = vld [vmem:[%s2 + $0x14] sm:$0xf]
        %v336 = vld [vmem:[%s2 + $0x18] sm:$0xff]
        %v337 = vld [vmem:[%s2 + $0x20] sm:$0xf]
        %v338 = vld [vmem:[%s2 + $0x24] sm:$0xff]
        %v339 = vld [vmem:[%s2 + $0x2c] sm:$0xf]
        %v340 = vld [vmem:[%s2 + $0x30] sm:$0xff]
        %v341 = vld [vmem:[%s2 + $0x38] sm:$0xf]
        %v342 = vld [vmem:[%s2 + $0x3c] sm:$0xff]
        %v343 = vld [vmem:[%s2 + $0x44] sm:$0xf]
        %v344 = vld [vmem:[%s2 + $0x48] sm:$0xff]
        %v345 = vld [vmem:[%s2 + $0x50] sm:$0xf]
        %v346 = vld [vmem:[%s2 + $0x54] sm:$0xff]
        %v347 = vld [vmem:[%s2 + $0x5c] sm:$0xf]
        %v364 = vunpack.c.l.b16 %v332
        %v365 = vunpack.c.h.b16 %v332
        %v366 = vunpack.c.l.b16 %v333
        %v367 = vunpack.c.l.b16 %v334
        %v368 = vunpack.c.h.b16 %v334
        %v369 = vunpack.c.l.b16 %v335
        %v370 = vunpack.c.l.b16 %v336
        %v371 = vunpack.c.h.b16 %v336
        %v372 = vunpack.c.l.b16 %v337
        %v373 = vunpack.c.l.b16 %v338
        %v374 = vunpack.c.h.b16 %v338
        %v375 = vunpack.c.l.b16 %v339
        %v376 = vunpack.c.l.b16 %v340
        %v377 = vunpack.c.h.b16 %v340
        %v378 = vunpack.c.l.b16 %v341
        %v379 = vunpack.c.l.b16 %v342
        %v380 = vunpack.c.h.b16 %v342
        %v381 = vunpack.c.l.b16 %v343
        %v382 = vunpack.c.l.b16 %v344
        %v383 = vunpack.c.h.b16 %v344
        %v384 = vunpack.c.l.b16 %v345
        %v385 = vunpack.c.l.b16 %v346
        %v386 = vunpack.c.h.b16 %v346
        %v387 = vunpack.c.l.b16 %v347
        %v388 = vpack.c.b16 %v367, %v364
        %v389 = vpack.c.b16 %v368, %v365
        %v390 = vpack.c.b16 %v369, %v366
        %v391 = vpack.c.b16 %v373, %v370
        %v392 = vpack.c.b16 %v374, %v371
        %v393 = vpack.c.b16 %v375, %v372
        %v394 = vpack.c.b16 %v379, %v376
        %v395 = vpack.c.b16 %v380, %v377
        %v396 = vpack.c.b16 %v381, %v378
        %v397 = vpack.c.b16 %v385, %v382
        %v398 = vpack.c.b16 %v386, %v383
        %v399 = vpack.c.b16 %v387, %v384
        %v413 = vsel %vm317, %v331, 0
        %415 = vmatprep.subr.bf16.mxu0 %v389
        %416 = vmatpush1.bf16.msra.mxu0 %v388
        %417 = vmatprep.subr.bf16.mxu0 %v392
        %418 = vmatpush1.bf16.msra.mxu0 %v391
        %419 = vmatprep.subr.bf16.mxu0 %v395
        %420 = vmatpush1.bf16.msra.mxu0 %v394
        %421 = vmatprep.subr.bf16.mxu0 %v398
        %422 = vmatpush1.bf16.msra.mxu0 %v397
        %423 = vmatprep.subr.bf16.mxu0 0
        %424 = vmatpush1.bf16.msra.mxu0 0
        %425 = vmatprep.subr.bf16.mxu0 0
        %426 = vmatpush1.bf16.msra.mxu0 0
        %427 = vmatprep.subr.bf16.mxu0 0
        %428 = vmatpush1.bf16.msra.mxu0 0
        %429 = vmatprep.subr.bf16.mxu0 0
        %430 = vmatpush1.bf16.msra.mxu0 0
        %431 = vmatprep.subr.bf16.mxu0 0
        %432 = vmatpush1.bf16.msra.mxu0 0
        %433 = vmatprep.subr.bf16.mxu0 0
        %434 = vmatpush1.bf16.msra.mxu0 0
        %435 = vmatprep.subr.bf16.mxu0 0
        %436 = vmatpush1.bf16.msra.mxu0 0
        %437 = vmatprep.subr.bf16.mxu0 0
        %438 = vmatpush1.bf16.msra.mxu0 0
        %439 = vmatprep.subr.bf16.mxu0 0
        %440 = vmatpush1.bf16.msra.mxu0 0
        %441 = vmatprep.subr.bf16.mxu0 0
        %442 = vmatpush1.bf16.msra.mxu0 0
        %443 = vmatprep.subr.bf16.mxu0 0
        %444 = vmatpush1.bf16.msra.mxu0 0
        %445 = vmatprep.subr.bf16.mxu0 0
        %446 = vmatpush1.bf16.msra.mxu0 0
        %447 = vmatprep.mubr.bf16.mxu0 0
        %448 = vmatmul.mubr.bf16.gmra.mrb[0].mxu0 %v413
        %v449 = vpop.f32.mrb[0].mxu0
        %v450 = vadd.f32 0.0, %v449
        %v451 = vpop.f32.mrb[0].mxu0
        %v452 = vadd.f32 0.0, %v451
        %v453 = vpop.f32.mrb[0].mxu0
        %v454 = vpop.f32.mrb[0].mxu0
        %455 = vdwg.mxu0
        %456 = vmatprep.subr.bf16.mxu0 0
        %457 = vmatpush1.bf16.msra.mxu0 %v390
        %458 = vmatprep.subr.bf16.mxu0 0
        %459 = vmatpush1.bf16.msra.mxu0 %v393
        %460 = vmatprep.subr.bf16.mxu0 0
        %461 = vmatpush1.bf16.msra.mxu0 %v396
        %462 = vmatprep.subr.bf16.mxu0 0
        %463 = vmatpush1.bf16.msra.mxu0 %v399
        %464 = vmatprep.subr.bf16.mxu0 0
        %465 = vmatpush1.bf16.msra.mxu0 0
        %466 = vmatprep.subr.bf16.mxu0 0
        %467 = vmatpush1.bf16.msra.mxu0 0
        %468 = vmatprep.subr.bf16.mxu0 0
        %469 = vmatpush1.bf16.msra.mxu0 0
        %470 = vmatprep.subr.bf16.mxu0 0
        %471 = vmatpush1.bf16.msra.mxu0 0
        %472 = vmatprep.subr.bf16.mxu0 0
        %473 = vmatpush1.bf16.msra.mxu0 0
        %474 = vmatprep.subr.bf16.mxu0 0
        %475 = vmatpush1.bf16.msra.mxu0 0
        %476 = vmatprep.subr.bf16.mxu0 0
        %477 = vmatpush1.bf16.msra.mxu0 0
        %478 = vmatprep.subr.bf16.mxu0 0
        %479 = vmatpush1.bf16.msra.mxu0 0
        %480 = vmatprep.subr.bf16.mxu0 0
        %481 = vmatpush1.bf16.msra.mxu0 0
        %482 = vmatprep.subr.bf16.mxu0 0
        %483 = vmatpush1.bf16.msra.mxu0 0
        %484 = vmatprep.subr.bf16.mxu0 0
        %485 = vmatpush1.bf16.msra.mxu0 0
        %486 = vmatprep.subr.bf16.mxu0 0
        %487 = vmatpush1.bf16.msra.mxu0 0
        %488 = vmatprep.mubr.bf16.mxu0 0
        %489 = vmatmul.mubr.bf16.gmra.mrb[0].mxu0 %v413
        %v490 = vpop.f32.mrb[0].mxu0
        %v491 = vadd.f32 0.0, %v490
        %v492 = vpop.f32.mrb[0].mxu0
        %v493 = vpop.f32.mrb[0].mxu0
        %v494 = vpop.f32.mrb[0].mxu0
        %495 = vdwg.mxu0
        %v496 = vmul.f32 %v450, %v313
        %v497 = vmul.f32 %v452, %v314
        %v498 = vadd.f32 %v496, %v497
        %v499 = vpack.c.bf16 %v498, %v498
        %v500 = vpack.c.bf16 %v491, %v491
        %v501 = vlaneseq
        %v502 = vshrl.u32 %v501, 7
        %v503 = vlaneseq
        %v504 = vand.u32 %v503, 127
        %vm505 = vcmp.ge.s32.totalorder %v502, %v504
        %v506 = vsel %vm505, 0.0, -1e+30
        %508 = vrot.lane.b32.xlu0 %v499, 64
        %v509 = vpop.permute.xlu0 %508
        %vm510 = vcmask 130048
        %v512 = vsel %vm510, %v499, 0
        %v515 = vsel %vm510, %v509, 0
        %517 = vmatprep.subr.bf16.mxu0 0
        %518 = vmatpush1.bf16.xpose.msra.mxu0 %v515
        %519 = vmatprep.subr.bf16.mxu0 0
        %520 = vmatpush1.bf16.xpose.msra.mxu0 0
        %521 = vmatprep.subr.bf16.mxu0 0
        %522 = vmatpush1.bf16.xpose.msra.mxu0 0
        %523 = vmatprep.subr.bf16.mxu0 0
        %524 = vmatpush1.bf16.xpose.msra.mxu0 0
        %525 = vmatprep.subr.bf16.mxu0 0
        %526 = vmatpush1.bf16.xpose.msra.mxu0 0
        %527 = vmatprep.subr.bf16.mxu0 0
        %528 = vmatpush1.bf16.xpose.msra.mxu0 0
        %529 = vmatprep.subr.bf16.mxu0 0
        %530 = vmatpush1.bf16.xpose.msra.mxu0 0
        %531 = vmatprep.subr.bf16.mxu0 0
        %532 = vmatpush1.bf16.xpose.msra.mxu0 0
        %533 = vmatprep.subr.bf16.mxu0 0
        %534 = vmatpush1.bf16.xpose.msra.mxu0 0
        %535 = vmatprep.subr.bf16.mxu0 0
        %536 = vmatpush1.bf16.xpose.msra.mxu0 0
        %537 = vmatprep.subr.bf16.mxu0 0
        %538 = vmatpush1.bf16.xpose.msra.mxu0 0
        %539 = vmatprep.subr.bf16.mxu0 0
        %540 = vmatpush1.bf16.xpose.msra.mxu0 0
        %541 = vmatprep.subr.bf16.mxu0 0
        %542 = vmatpush1.bf16.xpose.msra.mxu0 0
        %543 = vmatprep.subr.bf16.mxu0 0
        %544 = vmatpush1.bf16.xpose.msra.mxu0 0
        %545 = vmatprep.subr.bf16.mxu0 0
        %546 = vmatpush1.bf16.xpose.msra.mxu0 0
        %547 = vmatprep.subr.bf16.mxu0 0
        %548 = vmatpush1.bf16.xpose.msra.mxu0 0
        %549 = vmatprep.mubr.bf16.mxu0 0
        %550 = vmatmul.mubr.bf16.gmra.mrb[0].mxu0 %v512
        %v551 = vpop.f32.mrb[0].mxu0
        %v552 = vadd.f32 %v506, %v551
        %v553 = vpop.f32.mrb[0].mxu0
        %v554 = vpop.f32.mrb[0].mxu0
        %v555 = vpop.f32.mrb[0].mxu0
        %556 = vdwg.mxu0
        %vm557 = vcmask 64512
        %v558 = vsel %vm557, %v552, -inf
        %559 = vmax.xlane.f32.xlu0 %v558
        %v560 = vpop.xlane.xlu0 %559
        %v561 = vsub.f32 %v552, %v560
        %v562 = vmul.f32 %v561, 1.442695
        %v563 = vpow.pop %v562
        %v564 = vsel %vm557, %v563, 0.0
        %565 = vadd.xlane.f32.xlu0 %v564
        %v566 = vpop.xlane.xlu0 %565
        %v567 = vrcp.pop %v566
        %v568 = vmul.f32 %v563, %v567
        %v569 = vpack.c.bf16 %v568, %v568
        %v571 = vsel %vm557, %v569, 0
        %vm573 = vcmask 1043456
        %v575 = vsel %vm573, %v500, 0
        %577 = vmatprep.subr.bf16.mxu0 0
        %578 = vmatpush1.bf16.msra.mxu0 %v575
        %579 = vmatprep.subr.bf16.mxu0 0
        %580 = vmatpush1.bf16.msra.mxu0 0
        %581 = vmatprep.subr.bf16.mxu0 0
        %582 = vmatpush1.bf16.msra.mxu0 0
        %583 = vmatprep.subr.bf16.mxu0 0
        %584 = vmatpush1.bf16.msra.mxu0 0
        %585 = vmatprep.subr.bf16.mxu0 0
        %586 = vmatpush1.bf16.msra.mxu0 0
        %587 = vmatprep.subr.bf16.mxu0 0
        %588 = vmatpush1.bf16.msra.mxu0 0
        %589 = vmatprep.subr.bf16.mxu0 0
        %590 = vmatpush1.bf16.msra.mxu0 0
        %591 = vmatprep.subr.bf16.mxu0 0
        %592 = vmatpush1.bf16.msra.mxu0 0
        %593 = vmatprep.subr.bf16.mxu0 0
        %594 = vmatpush1.bf16.msra.mxu0 0
        %595 = vmatprep.subr.bf16.mxu0 0
        %596 = vmatpush1.bf16.msra.mxu0 0
        %597 = vmatprep.subr.bf16.mxu0 0
        %598 = vmatpush1.bf16.msra.mxu0 0
        %599 = vmatprep.subr.bf16.mxu0 0
        %600 = vmatpush1.bf16.msra.mxu0 0
        %601 = vmatprep.subr.bf16.mxu0 0
        %602 = vmatpush1.bf16.msra.mxu0 0
        %603 = vmatprep.subr.bf16.mxu0 0
        %604 = vmatpush1.bf16.msra.mxu0 0
        %605 = vmatprep.subr.bf16.mxu0 0
        %606 = vmatpush1.bf16.msra.mxu0 0
        %607 = vmatprep.subr.bf16.mxu0 0
        %608 = vmatpush1.bf16.msra.mxu0 0
        %609 = vmatprep.mubr.bf16.mxu0 0
        %610 = vmatmul.mubr.bf16.gmra.mrb[0].mxu0 %v571
        %v611 = vpop.f32.mrb[0].mxu0
        %v612 = vadd.f32 0.0, %v611
        %v613 = vpop.f32.mrb[0].mxu0
        %v614 = vpop.f32.mrb[0].mxu0
        %v615 = vpop.f32.mrb[0].mxu0
        %616 = vdwg.mxu0
        %v617 = vpack.c.bf16 %v612, %v612
        %618 = vrot.lane.b32.xlu0 %v499, 112
        %v619 = vpop.permute.xlu0 %618
        %620 = vrot.lane.b32.xlu0 %v499, 48
        %v621 = vpop.permute.xlu0 %620
        %v623 = vsel %vm510, %v619, 0
        %v626 = vsel %vm510, %v621, 0
        %628 = vmatprep.subr.bf16.mxu0 0
        %629 = vmatpush1.bf16.xpose.msra.mxu0 %v626
        %630 = vmatprep.subr.bf16.mxu0 0
        %631 = vmatpush1.bf16.xpose.msra.mxu0 0
        %632 = vmatprep.subr.bf16.mxu0 0
        %633 = vmatpush1.bf16.xpose.msra.mxu0 0
        %634 = vmatprep.subr.bf16.mxu0 0
        %635 = vmatpush1.bf16.xpose.msra.mxu0 0
        %636 = vmatprep.subr.bf16.mxu0 0
        %637 = vmatpush1.bf16.xpose.msra.mxu0 0
        %638 = vmatprep.subr.bf16.mxu0 0
        %639 = vmatpush1.bf16.xpose.msra.mxu0 0
        %640 = vmatprep.subr.bf16.mxu0 0
        %641 = vmatpush1.bf16.xpose.msra.mxu0 0
        %642 = vmatprep.subr.bf16.mxu0 0
        %643 = vmatpush1.bf16.xpose.msra.mxu0 0
        %644 = vmatprep.subr.bf16.mxu0 0
        %645 = vmatpush1.bf16.xpose.msra.mxu0 0
        %646 = vmatprep.subr.bf16.mxu0 0
        %647 = vmatpush1.bf16.xpose.msra.mxu0 0
        %648 = vmatprep.subr.bf16.mxu0 0
        %649 = vmatpush1.bf16.xpose.msra.mxu0 0
        %650 = vmatprep.subr.bf16.mxu0 0
        %651 = vmatpush1.bf16.xpose.msra.mxu0 0
        %652 = vmatprep.subr.bf16.mxu0 0
        %653 = vmatpush1.bf16.xpose.msra.mxu0 0
        %654 = vmatprep.subr.bf16.mxu0 0
        %655 = vmatpush1.bf16.xpose.msra.mxu0 0
        %656 = vmatprep.subr.bf16.mxu0 0
        %657 = vmatpush1.bf16.xpose.msra.mxu0 0
        %658 = vmatprep.subr.bf16.mxu0 0
        %659 = vmatpush1.bf16.xpose.msra.mxu0 0
        %660 = vmatprep.mubr.bf16.mxu0 0
        %661 = vmatmul.mubr.bf16.gmra.mrb[0].mxu0 %v623
        %v662 = vpop.f32.mrb[0].mxu0
        %v663 = vadd.f32 %v506, %v662
        %v664 = vpop.f32.mrb[0].mxu0
        %v665 = vpop.f32.mrb[0].mxu0
        %v666 = vpop.f32.mrb[0].mxu0
        %667 = vdwg.mxu0
        %v668 = vsel %vm557, %v663, -inf
        %669 = vmax.xlane.f32.xlu0 %v668
        %v670 = vpop.xlane.xlu0 %669
        %v671 = vsub.f32 %v663, %v670
        %v672 = vmul.f32 %v671, 1.442695
        %v673 = vpow.pop %v672
        %v674 = vsel %vm557, %v673, 0.0
        %675 = vadd.xlane.f32.xlu0 %v674
        %v676 = vpop.xlane.xlu0 %675
        %v677 = vrcp.pop %v676
        %v678 = vmul.f32 %v673, %v677
        %v679 = vpack.c.bf16 %v678, %v678
        %681 = vrot.lane.b32.xlu0 %v500, 112
        %v682 = vpop.permute.xlu0 %681
        %v684 = vsel %vm557, %v679, 0
        %v687 = vsel %vm573, %v682, 0
        %689 = vmatprep.subr.bf16.mxu0 0
        %690 = vmatpush1.bf16.msra.mxu0 %v687
        %691 = vmatprep.subr.bf16.mxu0 0
        %692 = vmatpush1.bf16.msra.mxu0 0
        %693 = vmatprep.subr.bf16.mxu0 0
        %694 = vmatpush1.bf16.msra.mxu0 0
        %695 = vmatprep.subr.bf16.mxu0 0
        %696 = vmatpush1.bf16.msra.mxu0 0
        %697 = vmatprep.subr.bf16.mxu0 0
        %698 = vmatpush1.bf16.msra.mxu0 0
        %699 = vmatprep.subr.bf16.mxu0 0
        %700 = vmatpush1.bf16.msra.mxu0 0
        %701 = vmatprep.subr.bf16.mxu0 0
        %702 = vmatpush1.bf16.msra.mxu0 0
        %703 = vmatprep.subr.bf16.mxu0 0
        %704 = vmatpush1.bf16.msra.mxu0 0
        %705 = vmatprep.subr.bf16.mxu0 0
        %706 = vmatpush1.bf16.msra.mxu0 0
        %707 = vmatprep.subr.bf16.mxu0 0
        %708 = vmatpush1.bf16.msra.mxu0 0
        %709 = vmatprep.subr.bf16.mxu0 0
        %710 = vmatpush1.bf16.msra.mxu0 0
        %711 = vmatprep.subr.bf16.mxu0 0
        %712 = vmatpush1.bf16.msra.mxu0 0
        %713 = vmatprep.subr.bf16.mxu0 0
        %714 = vmatpush1.bf16.msra.mxu0 0
        %715 = vmatprep.subr.bf16.mxu0 0
        %716 = vmatpush1.bf16.msra.mxu0 0
        %717 = vmatprep.subr.bf16.mxu0 0
        %718 = vmatpush1.bf16.msra.mxu0 0
        %719 = vmatprep.subr.bf16.mxu0 0
        %720 = vmatpush1.bf16.msra.mxu0 0
        %721 = vmatprep.mubr.bf16.mxu0 0
        %722 = vmatmul.mubr.bf16.gmra.mrb[0].mxu0 %v684
        %v723 = vpop.f32.mrb[0].mxu0
        %v724 = vadd.f32 0.0, %v723
        %v725 = vpop.f32.mrb[0].mxu0
        %v726 = vpop.f32.mrb[0].mxu0
        %v727 = vpop.f32.mrb[0].mxu0
        %728 = vdwg.mxu0
        %v729 = vpack.c.bf16 %v724, %v724
        %730 = vrot.lane.b32.xlu0 %v499, 96
        %v731 = vpop.permute.xlu0 %730
        %732 = vrot.lane.b32.xlu0 %v499, 32
        %v733 = vpop.permute.xlu0 %732
        %v735 = vsel %vm510, %v731, 0
        %v738 = vsel %vm510, %v733, 0
        %740 = vmatprep.subr.bf16.mxu0 0
        %741 = vmatpush1.bf16.xpose.msra.mxu0 %v738
        %742 = vmatprep.subr.bf16.mxu0 0
        %743 = vmatpush1.bf16.xpose.msra.mxu0 0
        %744 = vmatprep.subr.bf16.mxu0 0
        %745 = vmatpush1.bf16.xpose.msra.mxu0 0
        %746 = vmatprep.subr.bf16.mxu0 0
        %747 = vmatpush1.bf16.xpose.msra.mxu0 0
        %748 = vmatprep.subr.bf16.mxu0 0
        %749 = vmatpush1.bf16.xpose.msra.mxu0 0
        %750 = vmatprep.subr.bf16.mxu0 0
        %751 = vmatpush1.bf16.xpose.msra.mxu0 0
        %752 = vmatprep.subr.bf16.mxu0 0
        %753 = vmatpush1.bf16.xpose.msra.mxu0 0
        %754 = vmatprep.subr.bf16.mxu0 0
        %755 = vmatpush1.bf16.xpose.msra.mxu0 0
        %756 = vmatprep.subr.bf16.mxu0 0
        %757 = vmatpush1.bf16.xpose.msra.mxu0 0
        %758 = vmatprep.subr.bf16.mxu0 0
        %759 = vmatpush1.bf16.xpose.msra.mxu0 0
        %760 = vmatprep.subr.bf16.mxu0 0
        %761 = vmatpush1.bf16.xpose.msra.mxu0 0
        %762 = vmatprep.subr.bf16.mxu0 0
        %763 = vmatpush1.bf16.xpose.msra.mxu0 0
        %764 = vmatprep.subr.bf16.mxu0 0
        %765 = vmatpush1.bf16.xpose.msra.mxu0 0
        %766 = vmatprep.subr.bf16.mxu0 0
        %767 = vmatpush1.bf16.xpose.msra.mxu0 0
        %768 = vmatprep.subr.bf16.mxu0 0
        %769 = vmatpush1.bf16.xpose.msra.mxu0 0
        %770 = vmatprep.subr.bf16.mxu0 0
        %771 = vmatpush1.bf16.xpose.msra.mxu0 0
        %772 = vmatprep.mubr.bf16.mxu0 0
        %773 = vmatmul.mubr.bf16.gmra.mrb[0].mxu0 %v735
        %v774 = vpop.f32.mrb[0].mxu0
        %v775 = vadd.f32 %v506, %v774
        %v776 = vpop.f32.mrb[0].mxu0
        %v777 = vpop.f32.mrb[0].mxu0
        %v778 = vpop.f32.mrb[0].mxu0
        %779 = vdwg.mxu0
        %v780 = vsel %vm557, %v775, -inf
        %781 = vmax.xlane.f32.xlu0 %v780
        %v782 = vpop.xlane.xlu0 %781
        %v783 = vsub.f32 %v775, %v782
        %v784 = vmul.f32 %v783, 1.442695
        %v785 = vpow.pop %v784
        %v786 = vsel %vm557, %v785, 0.0
        %787 = vadd.xlane.f32.xlu0 %v786
        %v788 = vpop.xlane.xlu0 %787
        %v789 = vrcp.pop %v788
        %v790 = vmul.f32 %v785, %v789
        %v791 = vpack.c.bf16 %v790, %v790
        %792 = vrot.lane.b32.xlu0 %v500, 96
        %v793 = vpop.permute.xlu0 %792
        %v795 = vsel %vm557, %v791, 0
        %v798 = vsel %vm573, %v793, 0
        %800 = vmatprep.subr.bf16.mxu0 0
        %801 = vmatpush1.bf16.msra.mxu0 %v798
        %802 = vmatprep.subr.bf16.mxu0 0
        %803 = vmatpush1.bf16.msra.mxu0 0
        %804 = vmatprep.subr.bf16.mxu0 0
        %805 = vmatpush1.bf16.msra.mxu0 0
        %806 = vmatprep.subr.bf16.mxu0 0
        %807 = vmatpush1.bf16.msra.mxu0 0
        %808 = vmatprep.subr.bf16.mxu0 0
        %809 = vmatpush1.bf16.msra.mxu0 0
        %810 = vmatprep.subr.bf16.mxu0 0
        %811 = vmatpush1.bf16.msra.mxu0 0
        %812 = vmatprep.subr.bf16.mxu0 0
        %813 = vmatpush1.bf16.msra.mxu0 0
        %814 = vmatprep.subr.bf16.mxu0 0
        %815 = vmatpush1.bf16.msra.mxu0 0
        %816 = vmatprep.subr.bf16.mxu0 0
        %817 = vmatpush1.bf16.msra.mxu0 0
        %818 = vmatprep.subr.bf16.mxu0 0
        %819 = vmatpush1.bf16.msra.mxu0 0
        %820 = vmatprep.subr.bf16.mxu0 0
        %821 = vmatpush1.bf16.msra.mxu0 0
        %822 = vmatprep.subr.bf16.mxu0 0
        %823 = vmatpush1.bf16.msra.mxu0 0
        %824 = vmatprep.subr.bf16.mxu0 0
        %825 = vmatpush1.bf16.msra.mxu0 0
        %826 = vmatprep.subr.bf16.mxu0 0
        %827 = vmatpush1.bf16.msra.mxu0 0
        %828 = vmatprep.subr.bf16.mxu0 0
        %829 = vmatpush1.bf16.msra.mxu0 0
        %830 = vmatprep.subr.bf16.mxu0 0
        %831 = vmatpush1.bf16.msra.mxu0 0
        %832 = vmatprep.mubr.bf16.mxu0 0
        %833 = vmatmul.mubr.bf16.gmra.mrb[0].mxu0 %v795
        %v834 = vpop.f32.mrb[0].mxu0
        %v835 = vadd.f32 0.0, %v834
        %v836 = vpop.f32.mrb[0].mxu0
        %v837 = vpop.f32.mrb[0].mxu0
        %v838 = vpop.f32.mrb[0].mxu0
        %839 = vdwg.mxu0
        %v840 = vpack.c.bf16 %v835, %v835
        %841 = vrot.lane.b32.xlu0 %v499, 80
        %v842 = vpop.permute.xlu0 %841
        %843 = vrot.lane.b32.xlu0 %v499, 16
        %v844 = vpop.permute.xlu0 %843
        %v846 = vsel %vm510, %v842, 0
        %v849 = vsel %vm510, %v844, 0
        %851 = vmatprep.subr.bf16.mxu0 0
        %852 = vmatpush1.bf16.xpose.msra.mxu0 %v849
        %853 = vmatprep.subr.bf16.mxu0 0
        %854 = vmatpush1.bf16.xpose.msra.mxu0 0
        %855 = vmatprep.subr.bf16.mxu0 0
        %856 = vmatpush1.bf16.xpose.msra.mxu0 0
        %857 = vmatprep.subr.bf16.mxu0 0
        %858 = vmatpush1.bf16.xpose.msra.mxu0 0
        %859 = vmatprep.subr.bf16.mxu0 0
        %860 = vmatpush1.bf16.xpose.msra.mxu0 0
        %861 = vmatprep.subr.bf16.mxu0 0
        %862 = vmatpush1.bf16.xpose.msra.mxu0 0
        %863 = vmatprep.subr.bf16.mxu0 0
        %864 = vmatpush1.bf16.xpose.msra.mxu0 0
        %865 = vmatprep.subr.bf16.mxu0 0
        %866 = vmatpush1.bf16.xpose.msra.mxu0 0
        %867 = vmatprep.subr.bf16.mxu0 0
        %868 = vmatpush1.bf16.xpose.msra.mxu0 0
        %869 = vmatprep.subr.bf16.mxu0 0
        %870 = vmatpush1.bf16.xpose.msra.mxu0 0
        %871 = vmatprep.subr.bf16.mxu0 0
        %872 = vmatpush1.bf16.xpose.msra.mxu0 0
        %873 = vmatprep.subr.bf16.mxu0 0
        %874 = vmatpush1.bf16.xpose.msra.mxu0 0
        %875 = vmatprep.subr.bf16.mxu0 0
        %876 = vmatpush1.bf16.xpose.msra.mxu0 0
        %877 = vmatprep.subr.bf16.mxu0 0
        %878 = vmatpush1.bf16.xpose.msra.mxu0 0
        %879 = vmatprep.subr.bf16.mxu0 0
        %880 = vmatpush1.bf16.xpose.msra.mxu0 0
        %881 = vmatprep.subr.bf16.mxu0 0
        %882 = vmatpush1.bf16.xpose.msra.mxu0 0
        %883 = vmatprep.mubr.bf16.mxu0 0
        %884 = vmatmul.mubr.bf16.gmra.mrb[0].mxu0 %v846
        %v885 = vpop.f32.mrb[0].mxu0
        %v886 = vadd.f32 %v506, %v885
        %v887 = vpop.f32.mrb[0].mxu0
        %v888 = vpop.f32.mrb[0].mxu0
        %v889 = vpop.f32.mrb[0].mxu0
        %890 = vdwg.mxu0
        %v891 = vsel %vm557, %v886, -inf
        %892 = vmax.xlane.f32.xlu0 %v891
        %v893 = vpop.xlane.xlu0 %892
        %v894 = vsub.f32 %v886, %v893
        %v895 = vmul.f32 %v894, 1.442695
        %v896 = vpow.pop %v895
        %v897 = vsel %vm557, %v896, 0.0
        %898 = vadd.xlane.f32.xlu0 %v897
        %v899 = vpop.xlane.xlu0 %898
        %v900 = vrcp.pop %v899
        %v901 = vmul.f32 %v896, %v900
        %v902 = vpack.c.bf16 %v901, %v901
        %903 = vrot.lane.b32.xlu0 %v500, 80
        %v904 = vpop.permute.xlu0 %903
        %v906 = vsel %vm557, %v902, 0
        %v909 = vsel %vm573, %v904, 0
        %911 = vmatprep.subr.bf16.mxu0 0
        %912 = vmatpush1.bf16.msra.mxu0 %v909
        %913 = vmatprep.subr.bf16.mxu0 0
        %914 = vmatpush1.bf16.msra.mxu0 0
        %915 = vmatprep.subr.bf16.mxu0 0
        %916 = vmatpush1.bf16.msra.mxu0 0
        %917 = vmatprep.subr.bf16.mxu0 0
        %918 = vmatpush1.bf16.msra.mxu0 0
        %919 = vmatprep.subr.bf16.mxu0 0
        %920 = vmatpush1.bf16.msra.mxu0 0
        %921 = vmatprep.subr.bf16.mxu0 0
        %922 = vmatpush1.bf16.msra.mxu0 0
        %923 = vmatprep.subr.bf16.mxu0 0
        %924 = vmatpush1.bf16.msra.mxu0 0
        %925 = vmatprep.subr.bf16.mxu0 0
        %926 = vmatpush1.bf16.msra.mxu0 0
        %927 = vmatprep.subr.bf16.mxu0 0
        %928 = vmatpush1.bf16.msra.mxu0 0
        %929 = vmatprep.subr.bf16.mxu0 0
        %930 = vmatpush1.bf16.msra.mxu0 0
        %931 = vmatprep.subr.bf16.mxu0 0
        %932 = vmatpush1.bf16.msra.mxu0 0
        %933 = vmatprep.subr.bf16.mxu0 0
        %934 = vmatpush1.bf16.msra.mxu0 0
        %935 = vmatprep.subr.bf16.mxu0 0
        %936 = vmatpush1.bf16.msra.mxu0 0
        %937 = vmatprep.subr.bf16.mxu0 0
        %938 = vmatpush1.bf16.msra.mxu0 0
        %939 = vmatprep.subr.bf16.mxu0 0
        %940 = vmatpush1.bf16.msra.mxu0 0
        %941 = vmatprep.subr.bf16.mxu0 0
        %942 = vmatpush1.bf16.msra.mxu0 0
        %943 = vmatprep.mubr.bf16.mxu0 0
        %944 = vmatmul.mubr.bf16.gmra.mrb[0].mxu0 %v906
        %v945 = vpop.f32.mrb[0].mxu0
        %v946 = vadd.f32 0.0, %v945
        %v947 = vpop.f32.mrb[0].mxu0
        %v948 = vpop.f32.mrb[0].mxu0
        %v949 = vpop.f32.mrb[0].mxu0
        %950 = vdwg.mxu0
        %v951 = vpack.c.bf16 %v946, %v946
        %953 = vrot.lane.b32.xlu0 %v729, 16
        %v954 = vpop.permute.xlu0 %953
        %956 = vrot.lane.b32.xlu0 %v840, 32
        %v957 = vpop.permute.xlu0 %956
        %959 = vrot.lane.b32.xlu0 %v951, 48
        %v960 = vpop.permute.xlu0 %959
        %v963 = vsel %vm510, %v617, %v954
        %vm964 = vcmask 261120
        %v966 = vsel %vm964, %v963, %v957
        %vm967 = vcmask 392192
        %v969 = vsel %vm967, %v966, %v960
        %v970 = vld [vmem:[#allocation7] sm:$0xf]
        %v971 = vld [vmem:[#allocation7 + $0x4] sm:$0xf]
        %v972 = vld [vmem:[#allocation7 + $0x8] sm:$0xf]
        %v973 = vld [vmem:[#allocation7 + $0xc] sm:$0xf]
        %v974 = vld [vmem:[#allocation7 + $0x10] sm:$0xf]
        %v975 = vld [vmem:[#allocation7 + $0x14] sm:$0xf]
        %v976 = vld [vmem:[#allocation7 + $0x18] sm:$0xf]
        %v977 = vld [vmem:[#allocation7 + $0x1c] sm:$0xf]
        %v978 = vlaneseq
        %v979 = vshrl.u32 %v978, 7
        %v980 = vsub.s32 1, %v979
        %v981 = vrot.slane %v315, %v980
        %v990 = vunpack.c.l.b16 %v970
        %v991 = vunpack.c.l.b16 %v971
        %v992 = vunpack.c.l.b16 %v972
        %v993 = vunpack.c.l.b16 %v973
        %v994 = vunpack.c.l.b16 %v974
        %v995 = vunpack.c.l.b16 %v975
        %v996 = vunpack.c.l.b16 %v976
        %v997 = vunpack.c.l.b16 %v977
        %v998 = vpack.c.b16 %v991, %v990
        %v999 = vpack.c.b16 %v993, %v992
        %v1000 = vpack.c.b16 %v995, %v994
        %v1001 = vpack.c.b16 %v997, %v996
        %v1006 = vsel %vm317, %v969, 0
        %1008 = vmatprep.subr.bf16.mxu0 0
        %1009 = vmatpush1.bf16.msra.mxu0 %v998
        %1010 = vmatprep.subr.bf16.mxu0 0
        %1011 = vmatpush1.bf16.msra.mxu0 %v999
        %1012 = vmatprep.subr.bf16.mxu0 0
        %1013 = vmatpush1.bf16.msra.mxu0 %v1000
        %1014 = vmatprep.subr.bf16.mxu0 0
        %1015 = vmatpush1.bf16.msra.mxu0 %v1001
        %1016 = vmatprep.subr.bf16.mxu0 0
        %1017 = vmatpush1.bf16.msra.mxu0 0
        %1018 = vmatprep.subr.bf16.mxu0 0
        %1019 = vmatpush1.bf16.msra.mxu0 0
        %1020 = vmatprep.subr.bf16.mxu0 0
        %1021 = vmatpush1.bf16.msra.mxu0 0
        %1022 = vmatprep.subr.bf16.mxu0 0
        %1023 = vmatpush1.bf16.msra.mxu0 0
        %1024 = vmatprep.subr.bf16.mxu0 0
        %1025 = vmatpush1.bf16.msra.mxu0 0
        %1026 = vmatprep.subr.bf16.mxu0 0
        %1027 = vmatpush1.bf16.msra.mxu0 0
        %1028 = vmatprep.subr.bf16.mxu0 0
        %1029 = vmatpush1.bf16.msra.mxu0 0
        %1030 = vmatprep.subr.bf16.mxu0 0
        %1031 = vmatpush1.bf16.msra.mxu0 0
        %1032 = vmatprep.subr.bf16.mxu0 0
        %1033 = vmatpush1.bf16.msra.mxu0 0
        %1034 = vmatprep.subr.bf16.mxu0 0
        %1035 = vmatpush1.bf16.msra.mxu0 0
        %1036 = vmatprep.subr.bf16.mxu0 0
        %1037 = vmatpush1.bf16.msra.mxu0 0
        %1038 = vmatprep.subr.bf16.mxu0 0
        %1039 = vmatpush1.bf16.msra.mxu0 0
        %1040 = vmatprep.mubr.bf16.mxu0 0
        %1041 = vmatmul.mubr.bf16.gmra.mrb[0].mxu0 %v1006
        %v1042 = vpop.f32.mrb[0].mxu0
        %v1043 = vadd.f32 %v981, %v1042
        %v1044 = vpop.f32.mrb[0].mxu0
        %v1045 = vpop.f32.mrb[0].mxu0
        %v1046 = vpop.f32.mrb[0].mxu0
        %1047 = vdwg.mxu0
        %v1048 = vpack.c.bf16 %v1043, %v1043
        %v1049 = vunpack.c.l.bf16 %v1048
        %v1050 = vadd.f32 %v312, %v1049
        %v1051 = vmul.f32 %v1050, %v1050
        %v1052 = vsel %vm317, %v1051, 0.0
        %1053 = vadd.xlane.f32.xlu0 %v1052
        %v1054 = vpop.xlane.xlu0 %1053
        %v1055 = vmul.f32 %v1054, %v321
        %v1056 = vadd.f32 %v1055, 1e-05
        %v1057 = vrsqrt.pop %v1056
        %v1058 = vmul.f32 %v1050, %v1057
        %1060 = vrot.lane.b32.xlu0 %v329, 64
        %v1061 = vpop.permute.xlu0 %1060
        %v1063 = vmul.f32 %v1058, %v1061
        %v1064 = vpack.c.bf16 %v1063, %v1063
        %v1065 = vld [vmem:[#allocation8] sm:$0xff]
        %v1066 = vld [vmem:[#allocation8 + $0x8] sm:$0xff]
        %v1067 = vld [vmem:[#allocation8 + $0x10] sm:$0xff]
        %v1068 = vld [vmem:[#allocation8 + $0x18] sm:$0xff]
        %v1069 = vld [vmem:[#allocation8 + $0x20] sm:$0xff]
        %v1070 = vld [vmem:[#allocation8 + $0x28] sm:$0xff]
        %v1071 = vld [vmem:[#allocation8 + $0x30] sm:$0xff]
        %v1072 = vld [vmem:[#allocation8 + $0x38] sm:$0xff]
        %v1081 = vunpack.c.l.b16 %v1065
        %v1082 = vunpack.c.h.b16 %v1065
        %v1083 = vunpack.c.l.b16 %v1066
        %v1084 = vunpack.c.h.b16 %v1066
        %v1085 = vunpack.c.l.b16 %v1067
        %v1086 = vunpack.c.h.b16 %v1067
        %v1087 = vunpack.c.l.b16 %v1068
        %v1088 = vunpack.c.h.b16 %v1068
        %v1089 = vunpack.c.l.b16 %v1069
        %v1090 = vunpack.c.h.b16 %v1069
        %v1091 = vunpack.c.l.b16 %v1070
        %v1092 = vunpack.c.h.b16 %v1070
        %v1093 = vunpack.c.l.b16 %v1071
        %v1094 = vunpack.c.h.b16 %v1071
        %v1095 = vunpack.c.l.b16 %v1072
        %v1096 = vunpack.c.h.b16 %v1072
        %v1097 = vpack.c.b16 %v1083, %v1081
        %v1098 = vpack.c.b16 %v1084, %v1082
        %v1099 = vpack.c.b16 %v1087, %v1085
        %v1100 = vpack.c.b16 %v1088, %v1086
        %v1101 = vpack.c.b16 %v1091, %v1089
        %v1102 = vpack.c.b16 %v1092, %v1090
        %v1103 = vpack.c.b16 %v1095, %v1093
        %v1104 = vpack.c.b16 %v1096, %v1094
        %v1114 = vsel %vm317, %v1064, 0
        %1116 = vmatprep.subr.bf16.mxu0 %v1098
        %1117 = vmatpush1.bf16.msra.mxu0 %v1097
        %1118 = vmatprep.subr.bf16.mxu0 %v1100
        %1119 = vmatpush1.bf16.msra.mxu0 %v1099
        %1120 = vmatprep.subr.bf16.mxu0 %v1102
        %1121 = vmatpush1.bf16.msra.mxu0 %v1101
        %1122 = vmatprep.subr.bf16.mxu0 %v1104
        %1123 = vmatpush1.bf16.msra.mxu0 %v1103
        %1124 = vmatprep.subr.bf16.mxu0 0
        %1125 = vmatpush1.bf16.msra.mxu0 0
        %1126 = vmatprep.subr.bf16.mxu0 0
        %1127 = vmatpush1.bf16.msra.mxu0 0
        %1128 = vmatprep.subr.bf16.mxu0 0
        %1129 = vmatpush1.bf16.msra.mxu0 0
        %1130 = vmatprep.subr.bf16.mxu0 0
        %1131 = vmatpush1.bf16.msra.mxu0 0
        %1132 = vmatprep.subr.bf16.mxu0 0
        %1133 = vmatpush1.bf16.msra.mxu0 0
        %1134 = vmatprep.subr.bf16.mxu0 0
        %1135 = vmatpush1.bf16.msra.mxu0 0
        %1136 = vmatprep.subr.bf16.mxu0 0
        %1137 = vmatpush1.bf16.msra.mxu0 0
        %1138 = vmatprep.subr.bf16.mxu0 0
        %1139 = vmatpush1.bf16.msra.mxu0 0
        %1140 = vmatprep.subr.bf16.mxu0 0
        %1141 = vmatpush1.bf16.msra.mxu0 0
        %1142 = vmatprep.subr.bf16.mxu0 0
        %1143 = vmatpush1.bf16.msra.mxu0 0
        %1144 = vmatprep.subr.bf16.mxu0 0
        %1145 = vmatpush1.bf16.msra.mxu0 0
        %1146 = vmatprep.subr.bf16.mxu0 0
        %1147 = vmatpush1.bf16.msra.mxu0 0
        %1148 = vmatprep.mubr.bf16.mxu0 0
        %1149 = vmatmul.mubr.bf16.gmra.mrb[0].mxu0 %v1114
        %v1150 = vpop.f32.mrb[0].mxu0
        %v1151 = vadd.f32 0.0, %v1150
        %v1152 = vpop.f32.mrb[0].mxu0
        %v1153 = vadd.f32 0.0, %v1152
        %v1154 = vpop.f32.mrb[0].mxu0
        %v1155 = vpop.f32.mrb[0].mxu0
        %1156 = vdwg.mxu0
        %v1157 = vxor.u32 %v1151, 2147483648
        %v1158 = vmul.f32 %v1157, 1.442695
        %v1159 = vpow.pop %v1158
        %v1160 = vadd.f32 %v1159, 1.0
        %v1161 = vrcp.pop %v1160
        %v1162 = vmul.f32 1.0, %v1161
        %v1163 = vmul.f32 %v1151, %v1162
        %v1164 = vmul.f32 %v1163, %v1153
        %v1165 = vpack.c.bf16 %v1164, %v1164
        %v1166 = vld [vmem:[%s5] sm:$0xf]
        %v1167 = vld [vmem:[%s5 + $0x4] sm:$0xf]
        %v1168 = vld [vmem:[%s5 + $0x8] sm:$0xf]
        %v1169 = vld [vmem:[%s5 + $0xc] sm:$0xf]
        %v1170 = vld [vmem:[%s5 + $0x10] sm:$0xf]
        %v1171 = vld [vmem:[%s5 + $0x14] sm:$0xf]
        %v1172 = vld [vmem:[%s5 + $0x18] sm:$0xf]
        %v1173 = vld [vmem:[%s5 + $0x1c] sm:$0xf]
        %v1174 = vld [vmem:[%s5 + $0x20] sm:$0xf]
        %v1175 = vld [vmem:[%s5 + $0x24] sm:$0xf]
        %v1176 = vld [vmem:[%s5 + $0x28] sm:$0xf]
        %v1177 = vld [vmem:[%s5 + $0x2c] sm:$0xf]
        %v1178 = vld [vmem:[%s5 + $0x30] sm:$0xf]
        %v1179 = vld [vmem:[%s5 + $0x34] sm:$0xf]
        %v1180 = vld [vmem:[%s5 + $0x38] sm:$0xf]
        %v1181 = vld [vmem:[%s5 + $0x3c] sm:$0xf]
        %v1198 = vunpack.c.l.b16 %v1166
        %v1199 = vunpack.c.l.b16 %v1167
        %v1200 = vunpack.c.l.b16 %v1168
        %v1201 = vunpack.c.l.b16 %v1169
        %v1202 = vunpack.c.l.b16 %v1170
        %v1203 = vunpack.c.l.b16 %v1171
        %v1204 = vunpack.c.l.b16 %v1172
        %v1205 = vunpack.c.l.b16 %v1173
        %v1206 = vunpack.c.l.b16 %v1174
        %v1207 = vunpack.c.l.b16 %v1175
        %v1208 = vunpack.c.l.b16 %v1176
        %v1209 = vunpack.c.l.b16 %v1177
        %v1210 = vunpack.c.l.b16 %v1178
        %v1211 = vunpack.c.l.b16 %v1179
        %v1212 = vunpack.c.l.b16 %v1180
        %v1213 = vunpack.c.l.b16 %v1181
        %v1214 = vpack.c.b16 %v1199, %v1198
        %v1215 = vpack.c.b16 %v1201, %v1200
        %v1216 = vpack.c.b16 %v1203, %v1202
        %v1217 = vpack.c.b16 %v1205, %v1204
        %v1218 = vpack.c.b16 %v1207, %v1206
        %v1219 = vpack.c.b16 %v1209, %v1208
        %v1220 = vpack.c.b16 %v1211, %v1210
        %v1221 = vpack.c.b16 %v1213, %v1212
        %1230 = vmatprep.subr.bf16.mxu0 0
        %1231 = vmatpush1.bf16.msra.mxu0 %v1214
        %1232 = vmatprep.subr.bf16.mxu0 0
        %1233 = vmatpush1.bf16.msra.mxu0 %v1215
        %1234 = vmatprep.subr.bf16.mxu0 0
        %1235 = vmatpush1.bf16.msra.mxu0 %v1216
        %1236 = vmatprep.subr.bf16.mxu0 0
        %1237 = vmatpush1.bf16.msra.mxu0 %v1217
        %1238 = vmatprep.subr.bf16.mxu0 0
        %1239 = vmatpush1.bf16.msra.mxu0 %v1218
        %1240 = vmatprep.subr.bf16.mxu0 0
        %1241 = vmatpush1.bf16.msra.mxu0 %v1219
        %1242 = vmatprep.subr.bf16.mxu0 0
        %1243 = vmatpush1.bf16.msra.mxu0 %v1220
        %1244 = vmatprep.subr.bf16.mxu0 0
        %1245 = vmatpush1.bf16.msra.mxu0 %v1221
        %1246 = vmatprep.subr.bf16.mxu0 0
        %1247 = vmatpush1.bf16.msra.mxu0 0
        %1248 = vmatprep.subr.bf16.mxu0 0
        %1249 = vmatpush1.bf16.msra.mxu0 0
        %1250 = vmatprep.subr.bf16.mxu0 0
        %1251 = vmatpush1.bf16.msra.mxu0 0
        %1252 = vmatprep.subr.bf16.mxu0 0
        %1253 = vmatpush1.bf16.msra.mxu0 0
        %1254 = vmatprep.subr.bf16.mxu0 0
        %1255 = vmatpush1.bf16.msra.mxu0 0
        %1256 = vmatprep.subr.bf16.mxu0 0
        %1257 = vmatpush1.bf16.msra.mxu0 0
        %1258 = vmatprep.subr.bf16.mxu0 0
        %1259 = vmatpush1.bf16.msra.mxu0 0
        %1260 = vmatprep.subr.bf16.mxu0 0
        %1261 = vmatpush1.bf16.msra.mxu0 0
        %1262 = vmatprep.mubr.bf16.mxu0 0
        %1263 = vmatmul.mubr.bf16.gmra.mrb[0].mxu0 %v1165
        %v1264 = vpop.f32.mrb[0].mxu0
        %v1265 = vadd.f32 0.0, %v1264
        %v1266 = vpop.f32.mrb[0].mxu0
        %v1267 = vpop.f32.mrb[0].mxu0
        %v1268 = vpop.f32.mrb[0].mxu0
        %1269 = vdwg.mxu0
        %v1270 = vpack.c.bf16 %v1265, %v1265
        %v1271 = vunpack.c.l.bf16 %v1270
        %v1272 = vadd.f32 %v1050, %v1271
        %1273 = vst.msk [vmem:[%s310] sm:$0xff] %vm317, %v1272
        %s1274 = sand.u32 %s164, 1
        %s1275 = scalar_lea.sflag [#allocation4], %s1274
        %s1276 = sand.u32 %s164, 1
        %s1277 = smul.addr %s1276, 8
        %s1278 = scalar_lea.vmem [#allocation10], %s1277
        // Predicated region
        $region61: #{tpu_custom_call.1} parent=43 // pred_check
          %p1279 = pneg %p174
        $region62: #{tpu_custom_call.1} parent=43 // pred_check_branch
          %1281 = sbr.rel (%p1279) target = $region64
        $region63: #{tpu_custom_call.1} parent=43 // pred_region
          %s1283 = ssub.s32 128, 128
          %1284 = vsyncadd %s1275, %s1283
          %s1285 = smul.addr %s25, 128
          %s1286 = scalar_lea.hbm %s6, %s1285
          %s1288 = sshll.u32 %s1278, 4
          %s1289 = int_to_ptr.vmem [resolvable:$true] %s1288
          %1291 = dma.vmem_to_hbm [thread:$0]  %s1289, 128, %s1286, %s1275
        $region64: #{tpu_custom_call.1} parent=43 // pred_fallthru
          _
      $region44: #{tpu_custom_call.1} parent=5 // pred_fallthru
        _
      %p1292 = scmp.le.s32.totalorder 2, %s20
      // Predicated region
      $region65: #{tpu_custom_call.1} parent=5 // pred_check
        %p1293 = pneg %p1292
      $region66: #{tpu_custom_call.1} parent=5 // pred_check_branch
        %1295 = sbr.rel (%p1293) target = $region68
      $region67: #{tpu_custom_call.1} parent=5 // pred_region
        %s1296 = ssub.s32 %s20, 2
        // Predicated region
        $region69: #{tpu_custom_call.1} parent=67 // pred_check
          %p1297 = pneg %p180
        $region70: #{tpu_custom_call.1} parent=67 // pred_check_branch
          %1299 = sbr.rel (%p1297) target = $region72
        $region71: #{tpu_custom_call.1} parent=67 // pred_region
          %s1300 = sand.u32 %s165, 1
          %s1301 = scalar_lea.sflag [#allocation4], %s1300
          %s1302 = sand.u32 %s165, 1
          %s1303 = smul.addr %s1302, 8
          %s1304 = scalar_lea.vmem [#allocation10], %s1303
          %1305 = dma.done %s1301, 128
        $region72: #{tpu_custom_call.1} parent=67 // pred_fallthru
          _
      $region68: #{tpu_custom_call.1} parent=5 // pred_fallthru
        _
    $region6: #{tpu_custom_call.1} parent=1 // loop_footer
      %s24 = sadd.s32 1, %s20
    $region7: #{tpu_custom_call.1} parent=1 // loop_footer_branch
      %19 = sbr.rel target = $region3
    $region8: #{tpu_custom_call.1} parent=1 // loop_exit
      _
    %1306 = vsyncpa [#allocation3], 1
    %s1307 = scalar_lea.sflag [#allocation3], 1
    %1308 = vsyncpa %s1307, 1
    %1309 = vsyncpa [#allocation6], 1
    %1310 = vsyncpa [#allocation9], 1
    %1311 = vsyncpa [#allocation4], 1
    %s1312 = scalar_lea.sflag [#allocation4], 1
    %1313 = vsyncpa %s1312, 1

</llo_original>
